<compile_context>
chip_gen: v7x
topology: tpu7x:2x2x1
jax: 0.10.0
libtpu: 0.0.40
codegen_flags: <defaults>
</compile_context>

<pallas_src>
import jax
import jax.numpy as jnp
from jax.experimental import pallas as pl
from jax.experimental.pallas import tpu as pltpu

INPUT_SIZE = 9
HIDDEN = 32
NUM_LAYERS = 3


def _round_up(n, m):
    return ((n + m - 1) // m) * m


def rnn_head_kernel(x_ref, wih0T_ref, wpack_ref, b_ref, wout_ref, bout_ref, out_ref):
    """Stacked tanh-RNN (wavefront schedule) + final Linear on last timestep.

    x_ref     : (bB, T, F)   raw input tile (F = 9, NOT padded)
    wih0T_ref : (F, H)       layer-0 input weight, transposed
    wpack_ref : (L, 2H, H)   per-layer packed [top ; W_hh^T]; layer 0 top = I,
                             layers >0 top = W_ih^T
    b_ref     : (L, 1, H)    b_ih + b_hh per layer
    wout_ref  : (1, H)       Linear(32->1) weight (row vector)
    bout_ref  : (1, 1)       Linear bias (SMEM scalar)
    out_ref   : (bB, 1)
    """
    x = x_ref[...]                               # (bB, T, F)
    bB, T, F = x.shape
    L, _, H = wpack_ref.shape

    # Layer-0 input projection for ALL timesteps at once: off the recurrent
    # critical path, and avoids padding x to 32 features in HBM.
    z0 = jnp.dot(x.reshape(bB * T, F), wih0T_ref[...],
                 preferred_element_type=jnp.float32)
    z0 = z0.reshape(bB, T, H)                    # (bB, T, H)

    wpack = wpack_ref[...]                       # (L, 2H, H)  hoisted
    bias = b_ref[...]                            # (L, 1, H)   hoisted

    zeros_bh = jnp.zeros((bB, H), jnp.float32)
    h_state = [zeros_bh] * L                     # recurrent hidden per layer
    y_prev = [zeros_bh] * L                      # layer output from prev step

    # Wavefront: at step s, layer l processes timestep t = s - l.
    # The L diagonal layer-updates are independent -> one batched matmul.
    for s in range(T + L - 1):
        inp = [z0[:, s, :] if s < T else zeros_bh]          # layer 0 input
        for l in range(1, L):
            inp.append(y_prev[l - 1])                       # layer l input
        lhs = jnp.stack(
            [jnp.concatenate([inp[l], h_state[l]], axis=-1) for l in range(L)],
            axis=0)                                         # (L, bB, 2H)
        new_h = jnp.tanh(
            jnp.einsum("lbk,lkh->lbh", lhs, wpack,
                       preferred_element_type=jnp.float32) + bias)  # (L, bB, H)
        for l in range(L):
            if l <= s <= l + T - 1:              # static validity on the diag
                h_state[l] = new_h[l]
                y_prev[l] = new_h[l]

    # h_state[L-1] == r_out[:, -1, :] (top layer, last timestep).
    # Final Linear(32->1) on the VPU/XLU: avoid an N=1 MXU push.
    h_top = h_state[L - 1]                               # (bB, H)
    out_ref[...] = (jnp.sum(h_top * wout_ref[...], axis=-1, keepdims=True)
                    + bout_ref[0, 0])


def rnn_lstm_gru_forward(x, params, block_b=128):
    """x: (B, T, INPUT_SIZE) float32 -> (B, 1) float32."""
    B, T, F = x.shape
    assert F == INPUT_SIZE
    wih0T, wpack, b_sum, wout, bout = params

    # Tile batch; pad to a multiple of the tile (padded rows are sliced off).
    bB = min(block_b, _round_up(B, 8))
    Bp = _round_up(B, bB)
    xp = x.astype(jnp.float32)
    if Bp != B:
        xp = jnp.pad(xp, ((0, Bp - B), (0, 0), (0, 0)))
    nb = Bp // bB

    vmem = pl.BlockSpec(memory_space=pltpu.MemorySpace.VMEM)
    out = pl.pallas_call(
        rnn_head_kernel,
        out_shape=jax.ShapeDtypeStruct((Bp, 1), jnp.float32),
        grid=(nb,),
        in_specs=[
            pl.BlockSpec((bB, T, F), lambda i: (i, 0, 0)),   # x: batch-tiled
            vmem,                                            # wih0T
            vmem,                                            # wpack
            vmem,                                            # b_sum
            vmem,                                            # wout
            pl.BlockSpec(memory_space=pltpu.MemorySpace.SMEM),  # bout scalar
        ],
        out_specs=pl.BlockSpec((bB, 1), lambda i: (i, 0)),
        compiler_params=pltpu.CompilerParams(
            dimension_semantics=("parallel",)),              # megacore on v7x
    )(xp, wih0T, wpack, b_sum, wout, bout)
    return out[:B]


def init_params(key):
    """PyTorch-style uniform(-1/sqrt(H), 1/sqrt(H)) init + kernel packing."""
    H = HIDDEN
    stdv = 1.0 / jnp.sqrt(jnp.float32(H))
    ks = jax.random.split(key, 4 * NUM_LAYERS + 2)

    w_ih, w_hh, b_ih, b_hh = [], [], [], []
    for l in range(NUM_LAYERS):
        in_dim = INPUT_SIZE if l == 0 else H
        k0, k1, k2, k3 = ks[4 * l: 4 * l + 4]
        w_ih.append(jax.random.uniform(k0, (H, in_dim), jnp.float32, -stdv, stdv))
        w_hh.append(jax.random.uniform(k1, (H, H), jnp.float32, -stdv, stdv))
        b_ih.append(jax.random.uniform(k2, (H,), jnp.float32, -stdv, stdv))
        b_hh.append(jax.random.uniform(k3, (H,), jnp.float32, -stdv, stdv))

    w_out = jax.random.uniform(ks[-2], (1, H), jnp.float32, -stdv, stdv)
    b_out = jax.random.uniform(ks[-1], (1,), jnp.float32, -stdv, stdv)

    # Kernel packing:
    #   layer 0:  concat(z0, h) @ [[I     ]      = z0 + h @ W_hh0^T
    #                              [W_hh0^T]]
    #   layer l>0: concat(y, h) @ [[W_ih^T]      = y @ W_ih^T + h @ W_hh^T
    #                              [W_hh^T]]
    wih0T = w_ih[0].T                                               # (F, H)
    packs = [jnp.concatenate([jnp.eye(H, dtype=jnp.float32), w_hh[0].T], axis=0)]
    for l in range(1, NUM_LAYERS):
        packs.append(jnp.concatenate([w_ih[l].T, w_hh[l].T], axis=0))
    wpack = jnp.stack(packs, axis=0)                                # (L, 2H, H)
    b_sum = jnp.stack([(bi + bh)[None, :] for bi, bh in zip(b_ih, b_hh)],
                      axis=0)                                       # (L, 1, H)
    wout = w_out                                                    # (1, H)
    bout = b_out.reshape(1, 1)                                      # (1, 1)

    raw = (w_ih, w_hh, b_ih, b_hh, w_out, b_out)
    packed = (wih0T, wpack, b_sum, wout, bout)
    return packed, raw


def reference_forward(x, raw):
    """Pure-JAX reference of the PyTorch forward (tanh RNN, 3 layers, + Linear)."""
    w_ih, w_hh, b_ih, b_hh, w_out, b_out = raw
    B, T, _ = x.shape
    seq = x.astype(jnp.float32)
    for l in range(NUM_LAYERS):
        h = jnp.zeros((B, HIDDEN), jnp.float32)
        outs = []
        for t in range(T):
            h = jnp.tanh(seq[:, t, :] @ w_ih[l].T + b_ih[l]
                         + h @ w_hh[l].T + b_hh[l])
            outs.append(h)
        seq = jnp.stack(outs, axis=1)
    last = seq[:, -1, :]
    return last @ w_out.T + b_out


if __name__ == "__main__":
    key = jax.random.PRNGKey(0)
    k_param, k_x = jax.random.split(key)

    B, T = 2, 8
    x = jax.random.normal(k_x, (B, T, INPUT_SIZE), jnp.float32)

    packed, raw = init_params(k_param)

    out = rnn_lstm_gru_forward(x, packed)
    out = jax.block_until_ready(out)

    ref = reference_forward(x, raw)
    assert out.shape == (B, 1)
    assert jnp.allclose(out, ref, atol=1e-4, rtol=1e-4), (out, ref)

    print("KERNEL_OK")
</pallas_src>

<mosaic_0001>
module attributes {stable_mosaic.version = 11 : i64} {
  func.func @rnn_head_kernel(%arg0: i32, %arg1: memref<8x8x9xf32, #tpu.memory_space<vmem>>, %arg2: memref<9x32xf32, #tpu.memory_space<vmem>>, %arg3: memref<3x64x32xf32, #tpu.memory_space<vmem>>, %arg4: memref<3x1x32xf32, #tpu.memory_space<vmem>>, %arg5: memref<1x32xf32, #tpu.memory_space<vmem>>, %arg6: memref<1x1xf32, #tpu.memory_space<smem>>, %arg7: memref<8x1xf32, #tpu.memory_space<vmem>>) attributes {dimension_semantics = [#tpu.dimension_semantics<parallel>], iteration_bounds = array<i64: 1>, scalar_prefetch = 0 : i64, scratch_operands = 0 : i64, tpu.core_type = #tpu.core_type<tc>, window_params = [{transform_indices = @transform_0, window_bounds = array<i64: 8, 8, 9>}, {pipeline_mode = #tpu.pipeline_mode<synchronous>, transform_indices = @transform_1, window_bounds = array<i64: 9, 32>}, {pipeline_mode = #tpu.pipeline_mode<synchronous>, transform_indices = @transform_2, window_bounds = array<i64: 3, 64, 32>}, {pipeline_mode = #tpu.pipeline_mode<synchronous>, transform_indices = @transform_3, window_bounds = array<i64: 3, 1, 32>}, {pipeline_mode = #tpu.pipeline_mode<synchronous>, transform_indices = @transform_4, window_bounds = array<i64: 1, 32>}, {transform_indices = @transform_5, window_bounds = array<i64: 1, 1>}, {transform_indices = @transform_6, window_bounds = array<i64: 8, 1>}]} {
    %c0 = arith.constant 0 : index
    %c0_0 = arith.constant 0 : index
    %c0_1 = arith.constant 0 : index
    %0 = vector.load %arg1[%c0, %c0_0, %c0_1] : memref<8x8x9xf32, #tpu.memory_space<vmem>>, vector<8x8x9xf32>
    %1 = vector.shape_cast %0 : vector<8x8x9xf32> to vector<64x9xf32>
    %c0_2 = arith.constant 0 : index
    %c0_3 = arith.constant 0 : index
    %2 = vector.load %arg2[%c0_2, %c0_3] : memref<9x32xf32, #tpu.memory_space<vmem>>, vector<9x32xf32>
    %cst = arith.constant dense<0.000000e+00> : vector<64x32xf32>
    %3 = tpu.matmul %1, %2, %cst {dimension_numbers = #tpu.dot_dimension_numbers<[1], [0], [0], [1], [0, 0, 1, 1], [], []>} : vector<64x9xf32>, vector<9x32xf32>, vector<64x32xf32> -> vector<64x32xf32>
    %4 = vector.shape_cast %3 : vector<64x32xf32> to vector<8x8x32xf32>
    %c0_4 = arith.constant 0 : index
    %c0_5 = arith.constant 0 : index
    %c0_6 = arith.constant 0 : index
    %5 = vector.load %arg3[%c0_4, %c0_5, %c0_6] : memref<3x64x32xf32, #tpu.memory_space<vmem>>, vector<3x64x32xf32>
    %c0_7 = arith.constant 0 : index
    %c0_8 = arith.constant 0 : index
    %c0_9 = arith.constant 0 : index
    %6 = vector.load %arg4[%c0_7, %c0_8, %c0_9] : memref<3x1x32xf32, #tpu.memory_space<vmem>>, vector<3x1x32xf32>
    %cst_10 = arith.constant 0.000000e+00 : f32
    %7 = vector.broadcast %cst_10 : f32 to vector<8x32xf32>
    %8 = vector.extract_strided_slice %4 {offsets = [0, 0, 0], sizes = [8, 1, 32], strides = [1, 1, 1]} : vector<8x8x32xf32> to vector<8x1x32xf32>
    %9 = vector.shape_cast %8 : vector<8x1x32xf32> to vector<8x32xf32>
    %10 = tpu.concatenate %9, %7 in 1 : vector<8x32xf32>, vector<8x32xf32> -> vector<8x64xf32>
    %11 = tpu.concatenate %7, %7 in 1 : vector<8x32xf32>, vector<8x32xf32> -> vector<8x64xf32>
    %12 = tpu.concatenate %7, %7 in 1 : vector<8x32xf32>, vector<8x32xf32> -> vector<8x64xf32>
    %13 = vector.shape_cast %10 : vector<8x64xf32> to vector<1x8x64xf32>
    %14 = vector.shape_cast %11 : vector<8x64xf32> to vector<1x8x64xf32>
    %15 = vector.shape_cast %12 : vector<8x64xf32> to vector<1x8x64xf32>
    %16 = tpu.concatenate %13, %14, %15 in 0 : vector<1x8x64xf32>, vector<1x8x64xf32>, vector<1x8x64xf32> -> vector<3x8x64xf32>
    "tpu.trace_start"() <{level = 10 : i32, message = "lbk,lkh->lbh"}> : () -> ()
    %cst_11 = arith.constant dense<0.000000e+00> : vector<3x8x32xf32>
    %17 = tpu.matmul %16, %5, %cst_11 {dimension_numbers = #tpu.dot_dimension_numbers<[2], [1], [1], [2], [0, 0, 0, 1, 1, 2], [0], [0]>} : vector<3x8x64xf32>, vector<3x64x32xf32>, vector<3x8x32xf32> -> vector<3x8x32xf32>
    "tpu.trace_stop"() : () -> ()
    %18 = vector.broadcast %6 : vector<3x1x32xf32> to vector<3x8x32xf32>
    %19 = arith.addf %17, %18 : vector<3x8x32xf32>
    %20 = math.tanh %19 : vector<3x8x32xf32>
    %21 = vector.extract_strided_slice %20 {offsets = [0, 0, 0], sizes = [1, 8, 32], strides = [1, 1, 1]} : vector<3x8x32xf32> to vector<1x8x32xf32>
    %22 = vector.shape_cast %21 : vector<1x8x32xf32> to vector<8x32xf32>
    %23 = vector.extract_strided_slice %20 {offsets = [0, 0, 0], sizes = [1, 8, 32], strides = [1, 1, 1]} : vector<3x8x32xf32> to vector<1x8x32xf32>
    %24 = vector.shape_cast %23 : vector<1x8x32xf32> to vector<8x32xf32>
    %25 = vector.extract_strided_slice %4 {offsets = [0, 1, 0], sizes = [8, 1, 32], strides = [1, 1, 1]} : vector<8x8x32xf32> to vector<8x1x32xf32>
    %26 = vector.shape_cast %25 : vector<8x1x32xf32> to vector<8x32xf32>
    %27 = tpu.concatenate %26, %22 in 1 : vector<8x32xf32>, vector<8x32xf32> -> vector<8x64xf32>
    %28 = tpu.concatenate %24, %7 in 1 : vector<8x32xf32>, vector<8x32xf32> -> vector<8x64xf32>
    %29 = tpu.concatenate %7, %7 in 1 : vector<8x32xf32>, vector<8x32xf32> -> vector<8x64xf32>
    %30 = vector.shape_cast %27 : vector<8x64xf32> to vector<1x8x64xf32>
    %31 = vector.shape_cast %28 : vector<8x64xf32> to vector<1x8x64xf32>
    %32 = vector.shape_cast %29 : vector<8x64xf32> to vector<1x8x64xf32>
    %33 = tpu.concatenate %30, %31, %32 in 0 : vector<1x8x64xf32>, vector<1x8x64xf32>, vector<1x8x64xf32> -> vector<3x8x64xf32>
    "tpu.trace_start"() <{level = 10 : i32, message = "lbk,lkh->lbh"}> : () -> ()
    %cst_12 = arith.constant dense<0.000000e+00> : vector<3x8x32xf32>
    %34 = tpu.matmul %33, %5, %cst_12 {dimension_numbers = #tpu.dot_dimension_numbers<[2], [1], [1], [2], [0, 0, 0, 1, 1, 2], [0], [0]>} : vector<3x8x64xf32>, vector<3x64x32xf32>, vector<3x8x32xf32> -> vector<3x8x32xf32>
    "tpu.trace_stop"() : () -> ()
    %35 = vector.broadcast %6 : vector<3x1x32xf32> to vector<3x8x32xf32>
    %36 = arith.addf %34, %35 : vector<3x8x32xf32>
    %37 = math.tanh %36 : vector<3x8x32xf32>
    %38 = vector.extract_strided_slice %37 {offsets = [0, 0, 0], sizes = [1, 8, 32], strides = [1, 1, 1]} : vector<3x8x32xf32> to vector<1x8x32xf32>
    %39 = vector.shape_cast %38 : vector<1x8x32xf32> to vector<8x32xf32>
    %40 = vector.extract_strided_slice %37 {offsets = [0, 0, 0], sizes = [1, 8, 32], strides = [1, 1, 1]} : vector<3x8x32xf32> to vector<1x8x32xf32>
    %41 = vector.shape_cast %40 : vector<1x8x32xf32> to vector<8x32xf32>
    %42 = vector.extract_strided_slice %37 {offsets = [1, 0, 0], sizes = [1, 8, 32], strides = [1, 1, 1]} : vector<3x8x32xf32> to vector<1x8x32xf32>
    %43 = vector.shape_cast %42 : vector<1x8x32xf32> to vector<8x32xf32>
    %44 = vector.extract_strided_slice %37 {offsets = [1, 0, 0], sizes = [1, 8, 32], strides = [1, 1, 1]} : vector<3x8x32xf32> to vector<1x8x32xf32>
    %45 = vector.shape_cast %44 : vector<1x8x32xf32> to vector<8x32xf32>
    %46 = vector.extract_strided_slice %4 {offsets = [0, 2, 0], sizes = [8, 1, 32], strides = [1, 1, 1]} : vector<8x8x32xf32> to vector<8x1x32xf32>
    %47 = vector.shape_cast %46 : vector<8x1x32xf32> to vector<8x32xf32>
    %48 = tpu.concatenate %47, %39 in 1 : vector<8x32xf32>, vector<8x32xf32> -> vector<8x64xf32>
    %49 = tpu.concatenate %41, %43 in 1 : vector<8x32xf32>, vector<8x32xf32> -> vector<8x64xf32>
    %50 = tpu.concatenate %45, %7 in 1 : vector<8x32xf32>, vector<8x32xf32> -> vector<8x64xf32>
    %51 = vector.shape_cast %48 : vector<8x64xf32> to vector<1x8x64xf32>
    %52 = vector.shape_cast %49 : vector<8x64xf32> to vector<1x8x64xf32>
    %53 = vector.shape_cast %50 : vector<8x64xf32> to vector<1x8x64xf32>
    %54 = tpu.concatenate %51, %52, %53 in 0 : vector<1x8x64xf32>, vector<1x8x64xf32>, vector<1x8x64xf32> -> vector<3x8x64xf32>
    "tpu.trace_start"() <{level = 10 : i32, message = "lbk,lkh->lbh"}> : () -> ()
    %cst_13 = arith.constant dense<0.000000e+00> : vector<3x8x32xf32>
    %55 = tpu.matmul %54, %5, %cst_13 {dimension_numbers = #tpu.dot_dimension_numbers<[2], [1], [1], [2], [0, 0, 0, 1, 1, 2], [0], [0]>} : vector<3x8x64xf32>, vector<3x64x32xf32>, vector<3x8x32xf32> -> vector<3x8x32xf32>
    "tpu.trace_stop"() : () -> ()
    %56 = vector.broadcast %6 : vector<3x1x32xf32> to vector<3x8x32xf32>
    %57 = arith.addf %55, %56 : vector<3x8x32xf32>
    %58 = math.tanh %57 : vector<3x8x32xf32>
    %59 = vector.extract_strided_slice %58 {offsets = [0, 0, 0], sizes = [1, 8, 32], strides = [1, 1, 1]} : vector<3x8x32xf32> to vector<1x8x32xf32>
    %60 = vector.shape_cast %59 : vector<1x8x32xf32> to vector<8x32xf32>
    %61 = vector.extract_strided_slice %58 {offsets = [0, 0, 0], sizes = [1, 8, 32], strides = [1, 1, 1]} : vector<3x8x32xf32> to vector<1x8x32xf32>
    %62 = vector.shape_cast %61 : vector<1x8x32xf32> to vector<8x32xf32>
    %63 = vector.extract_strided_slice %58 {offsets = [1, 0, 0], sizes = [1, 8, 32], strides = [1, 1, 1]} : vector<3x8x32xf32> to vector<1x8x32xf32>
    %64 = vector.shape_cast %63 : vector<1x8x32xf32> to vector<8x32xf32>
    %65 = vector.extract_strided_slice %58 {offsets = [1, 0, 0], sizes = [1, 8, 32], strides = [1, 1, 1]} : vector<3x8x32xf32> to vector<1x8x32xf32>
    %66 = vector.shape_cast %65 : vector<1x8x32xf32> to vector<8x32xf32>
    %67 = vector.extract_strided_slice %58 {offsets = [2, 0, 0], sizes = [1, 8, 32], strides = [1, 1, 1]} : vector<3x8x32xf32> to vector<1x8x32xf32>
    %68 = vector.shape_cast %67 : vector<1x8x32xf32> to vector<8x32xf32>
    %69 = vector.extract_strided_slice %4 {offsets = [0, 3, 0], sizes = [8, 1, 32], strides = [1, 1, 1]} : vector<8x8x32xf32> to vector<8x1x32xf32>
    %70 = vector.shape_cast %69 : vector<8x1x32xf32> to vector<8x32xf32>
    %71 = tpu.concatenate %70, %60 in 1 : vector<8x32xf32>, vector<8x32xf32> -> vector<8x64xf32>
    %72 = tpu.concatenate %62, %64 in 1 : vector<8x32xf32>, vector<8x32xf32> -> vector<8x64xf32>
    %73 = tpu.concatenate %66, %68 in 1 : vector<8x32xf32>, vector<8x32xf32> -> vector<8x64xf32>
    %74 = vector.shape_cast %71 : vector<8x64xf32> to vector<1x8x64xf32>
    %75 = vector.shape_cast %72 : vector<8x64xf32> to vector<1x8x64xf32>
    %76 = vector.shape_cast %73 : vector<8x64xf32> to vector<1x8x64xf32>
    %77 = tpu.concatenate %74, %75, %76 in 0 : vector<1x8x64xf32>, vector<1x8x64xf32>, vector<1x8x64xf32> -> vector<3x8x64xf32>
    "tpu.trace_start"() <{level = 10 : i32, message = "lbk,lkh->lbh"}> : () -> ()
    %cst_14 = arith.constant dense<0.000000e+00> : vector<3x8x32xf32>
    %78 = tpu.matmul %77, %5, %cst_14 {dimension_numbers = #tpu.dot_dimension_numbers<[2], [1], [1], [2], [0, 0, 0, 1, 1, 2], [0], [0]>} : vector<3x8x64xf32>, vector<3x64x32xf32>, vector<3x8x32xf32> -> vector<3x8x32xf32>
    "tpu.trace_stop"() : () -> ()
    %79 = vector.broadcast %6 : vector<3x1x32xf32> to vector<3x8x32xf32>
    %80 = arith.addf %78, %79 : vector<3x8x32xf32>
    %81 = math.tanh %80 : vector<3x8x32xf32>
    %82 = vector.extract_strided_slice %81 {offsets = [0, 0, 0], sizes = [1, 8, 32], strides = [1, 1, 1]} : vector<3x8x32xf32> to vector<1x8x32xf32>
    %83 = vector.shape_cast %82 : vector<1x8x32xf32> to vector<8x32xf32>
    %84 = vector.extract_strided_slice %81 {offsets = [0, 0, 0], sizes = [1, 8, 32], strides = [1, 1, 1]} : vector<3x8x32xf32> to vector<1x8x32xf32>
    %85 = vector.shape_cast %84 : vector<1x8x32xf32> to vector<8x32xf32>
    %86 = vector.extract_strided_slice %81 {offsets = [1, 0, 0], sizes = [1, 8, 32], strides = [1, 1, 1]} : vector<3x8x32xf32> to vector<1x8x32xf32>
    %87 = vector.shape_cast %86 : vector<1x8x32xf32> to vector<8x32xf32>
    %88 = vector.extract_strided_slice %81 {offsets = [1, 0, 0], sizes = [1, 8, 32], strides = [1, 1, 1]} : vector<3x8x32xf32> to vector<1x8x32xf32>
    %89 = vector.shape_cast %88 : vector<1x8x32xf32> to vector<8x32xf32>
    %90 = vector.extract_strided_slice %81 {offsets = [2, 0, 0], sizes = [1, 8, 32], strides = [1, 1, 1]} : vector<3x8x32xf32> to vector<1x8x32xf32>
    %91 = vector.shape_cast %90 : vector<1x8x32xf32> to vector<8x32xf32>
    %92 = vector.extract_strided_slice %4 {offsets = [0, 4, 0], sizes = [8, 1, 32], strides = [1, 1, 1]} : vector<8x8x32xf32> to vector<8x1x32xf32>
    %93 = vector.shape_cast %92 : vector<8x1x32xf32> to vector<8x32xf32>
    %94 = tpu.concatenate %93, %83 in 1 : vector<8x32xf32>, vector<8x32xf32> -> vector<8x64xf32>
    %95 = tpu.concatenate %85, %87 in 1 : vector<8x32xf32>, vector<8x32xf32> -> vector<8x64xf32>
    %96 = tpu.concatenate %89, %91 in 1 : vector<8x32xf32>, vector<8x32xf32> -> vector<8x64xf32>
    %97 = vector.shape_cast %94 : vector<8x64xf32> to vector<1x8x64xf32>
    %98 = vector.shape_cast %95 : vector<8x64xf32> to vector<1x8x64xf32>
    %99 = vector.shape_cast %96 : vector<8x64xf32> to vector<1x8x64xf32>
    %100 = tpu.concatenate %97, %98, %99 in 0 : vector<1x8x64xf32>, vector<1x8x64xf32>, vector<1x8x64xf32> -> vector<3x8x64xf32>
    "tpu.trace_start"() <{level = 10 : i32, message = "lbk,lkh->lbh"}> : () -> ()
    %cst_15 = arith.constant dense<0.000000e+00> : vector<3x8x32xf32>
    %101 = tpu.matmul %100, %5, %cst_15 {dimension_numbers = #tpu.dot_dimension_numbers<[2], [1], [1], [2], [0, 0, 0, 1, 1, 2], [0], [0]>} : vector<3x8x64xf32>, vector<3x64x32xf32>, vector<3x8x32xf32> -> vector<3x8x32xf32>
    "tpu.trace_stop"() : () -> ()
    %102 = vector.broadcast %6 : vector<3x1x32xf32> to vector<3x8x32xf32>
    %103 = arith.addf %101, %102 : vector<3x8x32xf32>
    %104 = math.tanh %103 : vector<3x8x32xf32>
    %105 = vector.extract_strided_slice %104 {offsets = [0, 0, 0], sizes = [1, 8, 32], strides = [1, 1, 1]} : vector<3x8x32xf32> to vector<1x8x32xf32>
    %106 = vector.shape_cast %105 : vector<1x8x32xf32> to vector<8x32xf32>
    %107 = vector.extract_strided_slice %104 {offsets = [0, 0, 0], sizes = [1, 8, 32], strides = [1, 1, 1]} : vector<3x8x32xf32> to vector<1x8x32xf32>
    %108 = vector.shape_cast %107 : vector<1x8x32xf32> to vector<8x32xf32>
    %109 = vector.extract_strided_slice %104 {offsets = [1, 0, 0], sizes = [1, 8, 32], strides = [1, 1, 1]} : vector<3x8x32xf32> to vector<1x8x32xf32>
    %110 = vector.shape_cast %109 : vector<1x8x32xf32> to vector<8x32xf32>
    %111 = vector.extract_strided_slice %104 {offsets = [1, 0, 0], sizes = [1, 8, 32], strides = [1, 1, 1]} : vector<3x8x32xf32> to vector<1x8x32xf32>
    %112 = vector.shape_cast %111 : vector<1x8x32xf32> to vector<8x32xf32>
    %113 = vector.extract_strided_slice %104 {offsets = [2, 0, 0], sizes = [1, 8, 32], strides = [1, 1, 1]} : vector<3x8x32xf32> to vector<1x8x32xf32>
    %114 = vector.shape_cast %113 : vector<1x8x32xf32> to vector<8x32xf32>
    %115 = vector.extract_strided_slice %4 {offsets = [0, 5, 0], sizes = [8, 1, 32], strides = [1, 1, 1]} : vector<8x8x32xf32> to vector<8x1x32xf32>
    %116 = vector.shape_cast %115 : vector<8x1x32xf32> to vector<8x32xf32>
    %117 = tpu.concatenate %116, %106 in 1 : vector<8x32xf32>, vector<8x32xf32> -> vector<8x64xf32>
    %118 = tpu.concatenate %108, %110 in 1 : vector<8x32xf32>, vector<8x32xf32> -> vector<8x64xf32>
    %119 = tpu.concatenate %112, %114 in 1 : vector<8x32xf32>, vector<8x32xf32> -> vector<8x64xf32>
    %120 = vector.shape_cast %117 : vector<8x64xf32> to vector<1x8x64xf32>
    %121 = vector.shape_cast %118 : vector<8x64xf32> to vector<1x8x64xf32>
    %122 = vector.shape_cast %119 : vector<8x64xf32> to vector<1x8x64xf32>
    %123 = tpu.concatenate %120, %121, %122 in 0 : vector<1x8x64xf32>, vector<1x8x64xf32>, vector<1x8x64xf32> -> vector<3x8x64xf32>
    "tpu.trace_start"() <{level = 10 : i32, message = "lbk,lkh->lbh"}> : () -> ()
    %cst_16 = arith.constant dense<0.000000e+00> : vector<3x8x32xf32>
    %124 = tpu.matmul %123, %5, %cst_16 {dimension_numbers = #tpu.dot_dimension_numbers<[2], [1], [1], [2], [0, 0, 0, 1, 1, 2], [0], [0]>} : vector<3x8x64xf32>, vector<3x64x32xf32>, vector<3x8x32xf32> -> vector<3x8x32xf32>
    "tpu.trace_stop"() : () -> ()
    %125 = vector.broadcast %6 : vector<3x1x32xf32> to vector<3x8x32xf32>
    %126 = arith.addf %124, %125 : vector<3x8x32xf32>
    %127 = math.tanh %126 : vector<3x8x32xf32>
    %128 = vector.extract_strided_slice %127 {offsets = [0, 0, 0], sizes = [1, 8, 32], strides = [1, 1, 1]} : vector<3x8x32xf32> to vector<1x8x32xf32>
    %129 = vector.shape_cast %128 : vector<1x8x32xf32> to vector<8x32xf32>
    %130 = vector.extract_strided_slice %127 {offsets = [0, 0, 0], sizes = [1, 8, 32], strides = [1, 1, 1]} : vector<3x8x32xf32> to vector<1x8x32xf32>
    %131 = vector.shape_cast %130 : vector<1x8x32xf32> to vector<8x32xf32>
    %132 = vector.extract_strided_slice %127 {offsets = [1, 0, 0], sizes = [1, 8, 32], strides = [1, 1, 1]} : vector<3x8x32xf32> to vector<1x8x32xf32>
    %133 = vector.shape_cast %132 : vector<1x8x32xf32> to vector<8x32xf32>
    %134 = vector.extract_strided_slice %127 {offsets = [1, 0, 0], sizes = [1, 8, 32], strides = [1, 1, 1]} : vector<3x8x32xf32> to vector<1x8x32xf32>
    %135 = vector.shape_cast %134 : vector<1x8x32xf32> to vector<8x32xf32>
    %136 = vector.extract_strided_slice %127 {offsets = [2, 0, 0], sizes = [1, 8, 32], strides = [1, 1, 1]} : vector<3x8x32xf32> to vector<1x8x32xf32>
    %137 = vector.shape_cast %136 : vector<1x8x32xf32> to vector<8x32xf32>
    %138 = vector.extract_strided_slice %4 {offsets = [0, 6, 0], sizes = [8, 1, 32], strides = [1, 1, 1]} : vector<8x8x32xf32> to vector<8x1x32xf32>
    %139 = vector.shape_cast %138 : vector<8x1x32xf32> to vector<8x32xf32>
    %140 = tpu.concatenate %139, %129 in 1 : vector<8x32xf32>, vector<8x32xf32> -> vector<8x64xf32>
    %141 = tpu.concatenate %131, %133 in 1 : vector<8x32xf32>, vector<8x32xf32> -> vector<8x64xf32>
    %142 = tpu.concatenate %135, %137 in 1 : vector<8x32xf32>, vector<8x32xf32> -> vector<8x64xf32>
    %143 = vector.shape_cast %140 : vector<8x64xf32> to vector<1x8x64xf32>
    %144 = vector.shape_cast %141 : vector<8x64xf32> to vector<1x8x64xf32>
    %145 = vector.shape_cast %142 : vector<8x64xf32> to vector<1x8x64xf32>
    %146 = tpu.concatenate %143, %144, %145 in 0 : vector<1x8x64xf32>, vector<1x8x64xf32>, vector<1x8x64xf32> -> vector<3x8x64xf32>
    "tpu.trace_start"() <{level = 10 : i32, message = "lbk,lkh->lbh"}> : () -> ()
    %cst_17 = arith.constant dense<0.000000e+00> : vector<3x8x32xf32>
    %147 = tpu.matmul %146, %5, %cst_17 {dimension_numbers = #tpu.dot_dimension_numbers<[2], [1], [1], [2], [0, 0, 0, 1, 1, 2], [0], [0]>} : vector<3x8x64xf32>, vector<3x64x32xf32>, vector<3x8x32xf32> -> vector<3x8x32xf32>
    "tpu.trace_stop"() : () -> ()
    %148 = vector.broadcast %6 : vector<3x1x32xf32> to vector<3x8x32xf32>
    %149 = arith.addf %147, %148 : vector<3x8x32xf32>
    %150 = math.tanh %149 : vector<3x8x32xf32>
    %151 = vector.extract_strided_slice %150 {offsets = [0, 0, 0], sizes = [1, 8, 32], strides = [1, 1, 1]} : vector<3x8x32xf32> to vector<1x8x32xf32>
    %152 = vector.shape_cast %151 : vector<1x8x32xf32> to vector<8x32xf32>
    %153 = vector.extract_strided_slice %150 {offsets = [0, 0, 0], sizes = [1, 8, 32], strides = [1, 1, 1]} : vector<3x8x32xf32> to vector<1x8x32xf32>
    %154 = vector.shape_cast %153 : vector<1x8x32xf32> to vector<8x32xf32>
    %155 = vector.extract_strided_slice %150 {offsets = [1, 0, 0], sizes = [1, 8, 32], strides = [1, 1, 1]} : vector<3x8x32xf32> to vector<1x8x32xf32>
    %156 = vector.shape_cast %155 : vector<1x8x32xf32> to vector<8x32xf32>
    %157 = vector.extract_strided_slice %150 {offsets = [1, 0, 0], sizes = [1, 8, 32], strides = [1, 1, 1]} : vector<3x8x32xf32> to vector<1x8x32xf32>
    %158 = vector.shape_cast %157 : vector<1x8x32xf32> to vector<8x32xf32>
    %159 = vector.extract_strided_slice %150 {offsets = [2, 0, 0], sizes = [1, 8, 32], strides = [1, 1, 1]} : vector<3x8x32xf32> to vector<1x8x32xf32>
    %160 = vector.shape_cast %159 : vector<1x8x32xf32> to vector<8x32xf32>
    %161 = vector.extract_strided_slice %4 {offsets = [0, 7, 0], sizes = [8, 1, 32], strides = [1, 1, 1]} : vector<8x8x32xf32> to vector<8x1x32xf32>
    %162 = vector.shape_cast %161 : vector<8x1x32xf32> to vector<8x32xf32>
    %163 = tpu.concatenate %162, %152 in 1 : vector<8x32xf32>, vector<8x32xf32> -> vector<8x64xf32>
    %164 = tpu.concatenate %154, %156 in 1 : vector<8x32xf32>, vector<8x32xf32> -> vector<8x64xf32>
    %165 = tpu.concatenate %158, %160 in 1 : vector<8x32xf32>, vector<8x32xf32> -> vector<8x64xf32>
    %166 = vector.shape_cast %163 : vector<8x64xf32> to vector<1x8x64xf32>
    %167 = vector.shape_cast %164 : vector<8x64xf32> to vector<1x8x64xf32>
    %168 = vector.shape_cast %165 : vector<8x64xf32> to vector<1x8x64xf32>
    %169 = tpu.concatenate %166, %167, %168 in 0 : vector<1x8x64xf32>, vector<1x8x64xf32>, vector<1x8x64xf32> -> vector<3x8x64xf32>
    "tpu.trace_start"() <{level = 10 : i32, message = "lbk,lkh->lbh"}> : () -> ()
    %cst_18 = arith.constant dense<0.000000e+00> : vector<3x8x32xf32>
    %170 = tpu.matmul %169, %5, %cst_18 {dimension_numbers = #tpu.dot_dimension_numbers<[2], [1], [1], [2], [0, 0, 0, 1, 1, 2], [0], [0]>} : vector<3x8x64xf32>, vector<3x64x32xf32>, vector<3x8x32xf32> -> vector<3x8x32xf32>
    "tpu.trace_stop"() : () -> ()
    %171 = vector.broadcast %6 : vector<3x1x32xf32> to vector<3x8x32xf32>
    %172 = arith.addf %170, %171 : vector<3x8x32xf32>
    %173 = math.tanh %172 : vector<3x8x32xf32>
    %174 = vector.extract_strided_slice %173 {offsets = [0, 0, 0], sizes = [1, 8, 32], strides = [1, 1, 1]} : vector<3x8x32xf32> to vector<1x8x32xf32>
    %175 = vector.shape_cast %174 : vector<1x8x32xf32> to vector<8x32xf32>
    %176 = vector.extract_strided_slice %173 {offsets = [0, 0, 0], sizes = [1, 8, 32], strides = [1, 1, 1]} : vector<3x8x32xf32> to vector<1x8x32xf32>
    %177 = vector.shape_cast %176 : vector<1x8x32xf32> to vector<8x32xf32>
    %178 = vector.extract_strided_slice %173 {offsets = [1, 0, 0], sizes = [1, 8, 32], strides = [1, 1, 1]} : vector<3x8x32xf32> to vector<1x8x32xf32>
    %179 = vector.shape_cast %178 : vector<1x8x32xf32> to vector<8x32xf32>
    %180 = vector.extract_strided_slice %173 {offsets = [1, 0, 0], sizes = [1, 8, 32], strides = [1, 1, 1]} : vector<3x8x32xf32> to vector<1x8x32xf32>
    %181 = vector.shape_cast %180 : vector<1x8x32xf32> to vector<8x32xf32>
    %182 = vector.extract_strided_slice %173 {offsets = [2, 0, 0], sizes = [1, 8, 32], strides = [1, 1, 1]} : vector<3x8x32xf32> to vector<1x8x32xf32>
    %183 = vector.shape_cast %182 : vector<1x8x32xf32> to vector<8x32xf32>
    %184 = tpu.concatenate %7, %175 in 1 : vector<8x32xf32>, vector<8x32xf32> -> vector<8x64xf32>
    %185 = tpu.concatenate %177, %179 in 1 : vector<8x32xf32>, vector<8x32xf32> -> vector<8x64xf32>
    %186 = tpu.concatenate %181, %183 in 1 : vector<8x32xf32>, vector<8x32xf32> -> vector<8x64xf32>
    %187 = vector.shape_cast %184 : vector<8x64xf32> to vector<1x8x64xf32>
    %188 = vector.shape_cast %185 : vector<8x64xf32> to vector<1x8x64xf32>
    %189 = vector.shape_cast %186 : vector<8x64xf32> to vector<1x8x64xf32>
    %190 = tpu.concatenate %187, %188, %189 in 0 : vector<1x8x64xf32>, vector<1x8x64xf32>, vector<1x8x64xf32> -> vector<3x8x64xf32>
    "tpu.trace_start"() <{level = 10 : i32, message = "lbk,lkh->lbh"}> : () -> ()
    %cst_19 = arith.constant dense<0.000000e+00> : vector<3x8x32xf32>
    %191 = tpu.matmul %190, %5, %cst_19 {dimension_numbers = #tpu.dot_dimension_numbers<[2], [1], [1], [2], [0, 0, 0, 1, 1, 2], [0], [0]>} : vector<3x8x64xf32>, vector<3x64x32xf32>, vector<3x8x32xf32> -> vector<3x8x32xf32>
    "tpu.trace_stop"() : () -> ()
    %192 = vector.broadcast %6 : vector<3x1x32xf32> to vector<3x8x32xf32>
    %193 = arith.addf %191, %192 : vector<3x8x32xf32>
    %194 = math.tanh %193 : vector<3x8x32xf32>
    %195 = vector.extract_strided_slice %194 {offsets = [1, 0, 0], sizes = [1, 8, 32], strides = [1, 1, 1]} : vector<3x8x32xf32> to vector<1x8x32xf32>
    %196 = vector.shape_cast %195 : vector<1x8x32xf32> to vector<8x32xf32>
    %197 = vector.extract_strided_slice %194 {offsets = [1, 0, 0], sizes = [1, 8, 32], strides = [1, 1, 1]} : vector<3x8x32xf32> to vector<1x8x32xf32>
    %198 = vector.shape_cast %197 : vector<1x8x32xf32> to vector<8x32xf32>
    %199 = vector.extract_strided_slice %194 {offsets = [2, 0, 0], sizes = [1, 8, 32], strides = [1, 1, 1]} : vector<3x8x32xf32> to vector<1x8x32xf32>
    %200 = vector.shape_cast %199 : vector<1x8x32xf32> to vector<8x32xf32>
    %201 = tpu.concatenate %7, %175 in 1 : vector<8x32xf32>, vector<8x32xf32> -> vector<8x64xf32>
    %202 = tpu.concatenate %177, %196 in 1 : vector<8x32xf32>, vector<8x32xf32> -> vector<8x64xf32>
    %203 = tpu.concatenate %198, %200 in 1 : vector<8x32xf32>, vector<8x32xf32> -> vector<8x64xf32>
    %204 = vector.shape_cast %201 : vector<8x64xf32> to vector<1x8x64xf32>
    %205 = vector.shape_cast %202 : vector<8x64xf32> to vector<1x8x64xf32>
    %206 = vector.shape_cast %203 : vector<8x64xf32> to vector<1x8x64xf32>
    %207 = tpu.concatenate %204, %205, %206 in 0 : vector<1x8x64xf32>, vector<1x8x64xf32>, vector<1x8x64xf32> -> vector<3x8x64xf32>
    "tpu.trace_start"() <{level = 10 : i32, message = "lbk,lkh->lbh"}> : () -> ()
    %cst_20 = arith.constant dense<0.000000e+00> : vector<3x8x32xf32>
    %208 = tpu.matmul %207, %5, %cst_20 {dimension_numbers = #tpu.dot_dimension_numbers<[2], [1], [1], [2], [0, 0, 0, 1, 1, 2], [0], [0]>} : vector<3x8x64xf32>, vector<3x64x32xf32>, vector<3x8x32xf32> -> vector<3x8x32xf32>
    "tpu.trace_stop"() : () -> ()
    %209 = vector.broadcast %6 : vector<3x1x32xf32> to vector<3x8x32xf32>
    %210 = arith.addf %208, %209 : vector<3x8x32xf32>
    %211 = math.tanh %210 : vector<3x8x32xf32>
    %212 = vector.extract_strided_slice %211 {offsets = [2, 0, 0], sizes = [1, 8, 32], strides = [1, 1, 1]} : vector<3x8x32xf32> to vector<1x8x32xf32>
    %213 = vector.shape_cast %212 : vector<1x8x32xf32> to vector<8x32xf32>
    %c0_21 = arith.constant 0 : index
    %c0_22 = arith.constant 0 : index
    %214 = vector.load %arg5[%c0_21, %c0_22] : memref<1x32xf32, #tpu.memory_space<vmem>>, vector<1x32xf32>
    %215 = vector.broadcast %214 : vector<1x32xf32> to vector<8x32xf32>
    %216 = arith.mulf %213, %215 : vector<8x32xf32>
    %cst_23 = arith.constant dense<0.000000e+00> : vector<8xf32>
    %217 = vector.multi_reduction <add>, %216, %cst_23 [1] : vector<8x32xf32> to vector<8xf32>
    %218 = vector.shape_cast %217 : vector<8xf32> to vector<8x1xf32>
    %c0_24 = arith.constant 0 : index
    %c0_25 = arith.constant 0 : index
    %219 = memref.load %arg6[%c0_24, %c0_25] : memref<1x1xf32, #tpu.memory_space<smem>>
    %220 = vector.broadcast %219 : f32 to vector<8x1xf32>
    %221 = arith.addf %218, %220 : vector<8x1xf32>
    %c0_26 = arith.constant 0 : index
    %c0_27 = arith.constant 0 : index
    %222 = vector.load %arg7[%c0_26, %c0_27] : memref<8x1xf32, #tpu.memory_space<vmem>>, vector<8x1xf32>
    tpu.vector_store %arg7[%c0_26, %c0_27], %221 {strides = array<i32>} : memref<8x1xf32, #tpu.memory_space<vmem>>, vector<8x1xf32>,
    return
  }
  func.func @transform_0(%arg0: i32) -> (i32, i32, i32) {
    %c0_i32 = arith.constant 0 : i32
    %c0_i32_0 = arith.constant 0 : i32
    %c0_i32_1 = arith.constant 0 : i32
    return %arg0, %c0_i32, %c0_i32_0 : i32, i32, i32
  }
  func.func @transform_1(%arg0: i32) -> (i32, i32) {
    %c0_i32 = arith.constant 0 : i32
    %c0_i32_0 = arith.constant 0 : i32
    %c0_i32_1 = arith.constant 0 : i32
    return %c0_i32, %c0_i32_0 : i32, i32
  }
  func.func @transform_2(%arg0: i32) -> (i32, i32, i32) {
    %c0_i32 = arith.constant 0 : i32
    %c0_i32_0 = arith.constant 0 : i32
    %c0_i32_1 = arith.constant 0 : i32
    %c0_i32_2 = arith.constant 0 : i32
    return %c0_i32, %c0_i32_0, %c0_i32_1 : i32, i32, i32
  }
  func.func @transform_3(%arg0: i32) -> (i32, i32, i32) {
    %c0_i32 = arith.constant 0 : i32
    %c0_i32_0 = arith.constant 0 : i32
    %c0_i32_1 = arith.constant 0 : i32
    %c0_i32_2 = arith.constant 0 : i32
    return %c0_i32, %c0_i32_0, %c0_i32_1 : i32, i32, i32
  }
  func.func @transform_4(%arg0: i32) -> (i32, i32) {
    %c0_i32 = arith.constant 0 : i32
    %c0_i32_0 = arith.constant 0 : i32
    %c0_i32_1 = arith.constant 0 : i32
    return %c0_i32, %c0_i32_0 : i32, i32
  }
  func.func @transform_5(%arg0: i32) -> (i32, i32) {
    %c0_i32 = arith.constant 0 : i32
    %c0_i32_0 = arith.constant 0 : i32
    %c0_i32_1 = arith.constant 0 : i32
    return %c0_i32, %c0_i32_0 : i32, i32
  }
  func.func @transform_6(%arg0: i32) -> (i32, i32) {
    %c0_i32 = arith.constant 0 : i32
    %c0_i32_0 = arith.constant 0 : i32
    return %arg0, %c0_i32 : i32, i32
  }
}

</mosaic_0001>

<llo_original>
// kernel: tpu_custom_call.1
$region0: #{tpu_custom_call.1}
  #allocation0 [shape = 'u32[]', space=smem, size = 0x4, offset = 0x4, fixed_abs, tag = 'smem constant byte address 0x4 - core index']
  #allocation1 [shape = 'u32[144,128]{1,0:T(1,128)}', space=vmem, size = 0x12000, scoped, tag = 'internal scratch']
  #allocation2 [shape = 'f32[1,1]{1,0:T(1,128)S(6)}', space=smem, size = 0x200, scoped, tag = 'scoped memory for tpu_custom_call.1']
  %s0 = inlined_call_operand.vmem [shape: f32[8,8,9], index: 0, kind: input, shape index: {}]
  %s1 = inlined_call_operand.vmem [shape: f32[9,32], index: 1, kind: input, shape index: {}]
  %s2 = inlined_call_operand.vmem [shape: f32[3,64,32], index: 2, kind: input, shape index: {}]
  %s3 = inlined_call_operand.vmem [shape: f32[3,1,32], index: 3, kind: input, shape index: {}]
  %s4 = inlined_call_operand.vmem [shape: f32[1,32], index: 4, kind: input, shape index: {}]
  %s5 = inlined_call_operand.<no memory space> [shape: f32[1,1], index: 5, kind: input, shape index: {}]
  %s6 = inlined_call_operand.vmem [shape: f32[8,1], index: 6, kind: output, shape index: {}]
  %s7 = sld [smem:[#allocation0]]
  $region34: #{tpu_custom_call.1} parent=0
    _
  %s9 = ssub.s32 1, %s7
  %s10 = scalar_select 0, %s9, %s7
  %11 = sst [smem:[#allocation2]] %s5
  // Predicated region
  $region2: #{tpu_custom_call.1} parent=0 // pred_check
    _
  $region3: #{tpu_custom_call.1} parent=0 // pred_check_branch
    %13 = sbr.rel (0) target = $region5
  $region4: #{tpu_custom_call.1} parent=0 // pred_region
    _
  $region5: #{tpu_custom_call.1} parent=0 // pred_fallthru
    _
  // Predicated region
  $region6: #{tpu_custom_call.1} parent=0 // pred_check
    _
  $region7: #{tpu_custom_call.1} parent=0 // pred_check_branch
    %15 = sbr.rel (0) target = $region9
  $region8: #{tpu_custom_call.1} parent=0 // pred_region
    _
  $region9: #{tpu_custom_call.1} parent=0 // pred_fallthru
    _
  // Predicated region
  $region10: #{tpu_custom_call.1} parent=0 // pred_check
    _
  $region11: #{tpu_custom_call.1} parent=0 // pred_check_branch
    %17 = sbr.rel (0) target = $region13
  $region12: #{tpu_custom_call.1} parent=0 // pred_region
    _
  $region13: #{tpu_custom_call.1} parent=0 // pred_fallthru
    _
  // Predicated region
  $region14: #{tpu_custom_call.1} parent=0 // pred_check
    _
  $region15: #{tpu_custom_call.1} parent=0 // pred_check_branch
    %19 = sbr.rel (0) target = $region17
  $region16: #{tpu_custom_call.1} parent=0 // pred_region
    _
  $region17: #{tpu_custom_call.1} parent=0 // pred_fallthru
    _
  // Predicated region
  $region18: #{tpu_custom_call.1} parent=0 // pred_check
    _
  $region19: #{tpu_custom_call.1} parent=0 // pred_check_branch
    %21 = sbr.rel (0) target = $region21
  $region20: #{tpu_custom_call.1} parent=0 // pred_region
    _
  $region21: #{tpu_custom_call.1} parent=0 // pred_fallthru
    _
  // Predicated region
  $region22: #{tpu_custom_call.1} parent=0 // pred_check
    _
  $region23: #{tpu_custom_call.1} parent=0 // pred_check_branch
    %23 = sbr.rel (0) target = $region25
  $region24: #{tpu_custom_call.1} parent=0 // pred_region
    _
  $region25: #{tpu_custom_call.1} parent=0 // pred_fallthru
    _
  %v24 = vld [vmem:[%s0] sm:$0xff]
  %v25 = vld [vmem:[%s0 + $0x8] sm:$0xff]
  %v26 = vld [vmem:[%s0 + $0x10] sm:$0xff]
  %v27 = vld [vmem:[%s0 + $0x18] sm:$0xff]
  %v28 = vld [vmem:[%s0 + $0x20] sm:$0xff]
  %v29 = vld [vmem:[%s0 + $0x28] sm:$0xff]
  %v30 = vld [vmem:[%s0 + $0x30] sm:$0xff]
  %v31 = vld [vmem:[%s0 + $0x38] sm:$0xff]
  %v32 = vld [vmem:[%s1] sm:$0xff]
  %v33 = vld [vmem:[%s1 + $0x8] sm:$0x1]
  %vm34 = vcmask 72704
  %v36 = vsel %vm34, %v24, 0
  %v39 = vsel %vm34, %v25, 0
  %v42 = vsel %vm34, %v26, 0
  %v45 = vsel %vm34, %v27, 0
  %v48 = vsel %vm34, %v28, 0
  %v51 = vsel %vm34, %v29, 0
  %v54 = vsel %vm34, %v30, 0
  %v57 = vsel %vm34, %v31, 0
  %vm59 = vcmask 1040384
  %v61 = vsel %vm59, %v33, 0
  %63 = vmatprep.subr.mxu0 0.0
  %64 = vmatpush1.msra.mxu0 %v32
  %65 = vmatprep.subr.mxu0 0.0
  %66 = vmatpush1.msra.mxu0 %v61
  %67 = vmatprep.subr.mxu0 0.0
  %68 = vmatpush1.msra.mxu0 0.0
  %69 = vmatprep.subr.mxu0 0.0
  %70 = vmatpush1.msra.mxu0 0.0
  %71 = vmatprep.subr.mxu0 0.0
  %72 = vmatpush1.msra.mxu0 0.0
  %73 = vmatprep.subr.mxu0 0.0
  %74 = vmatpush1.msra.mxu0 0.0
  %75 = vmatprep.subr.mxu0 0.0
  %76 = vmatpush1.msra.mxu0 0.0
  %77 = vmatprep.subr.mxu0 0.0
  %78 = vmatpush1.msra.mxu0 0.0
  %79 = vmatprep.subr.mxu0 0.0
  %80 = vmatpush1.msra.mxu0 0.0
  %81 = vmatprep.subr.mxu0 0.0
  %82 = vmatpush1.msra.mxu0 0.0
  %83 = vmatprep.subr.mxu0 0.0
  %84 = vmatpush1.msra.mxu0 0.0
  %85 = vmatprep.subr.mxu0 0.0
  %86 = vmatpush1.msra.mxu0 0.0
  %87 = vmatprep.subr.mxu0 0.0
  %88 = vmatpush1.msra.mxu0 0.0
  %89 = vmatprep.subr.mxu0 0.0
  %90 = vmatpush1.msra.mxu0 0.0
  %91 = vmatprep.subr.mxu0 0.0
  %92 = vmatpush1.msra.mxu0 0.0
  %93 = vmatprep.subr.mxu0 0.0
  %94 = vmatpush1.msra.mxu0 0.0
  %95 = vmatprep.subr.mxu0 0.0
  %96 = vmatpush1.msra.mxu0 0.0
  %97 = vmatprep.subr.mxu0 0.0
  %98 = vmatpush1.msra.mxu0 0.0
  %99 = vmatprep.subr.mxu0 0.0
  %100 = vmatpush1.msra.mxu0 0.0
  %101 = vmatprep.subr.mxu0 0.0
  %102 = vmatpush1.msra.mxu0 0.0
  %103 = vmatprep.subr.mxu0 0.0
  %104 = vmatpush1.msra.mxu0 0.0
  %105 = vmatprep.subr.mxu0 0.0
  %106 = vmatpush1.msra.mxu0 0.0
  %107 = vmatprep.subr.mxu0 0.0
  %108 = vmatpush1.msra.mxu0 0.0
  %109 = vmatprep.subr.mxu0 0.0
  %110 = vmatpush1.msra.mxu0 0.0
  %111 = vmatprep.subr.mxu0 0.0
  %112 = vmatpush1.msra.mxu0 0.0
  %113 = vmatprep.subr.mxu0 0.0
  %114 = vmatpush1.msra.mxu0 0.0
  %115 = vmatprep.subr.mxu0 0.0
  %116 = vmatpush1.msra.mxu0 0.0
  %117 = vmatprep.subr.mxu0 0.0
  %118 = vmatpush1.msra.mxu0 0.0
  %119 = vmatprep.subr.mxu0 0.0
  %120 = vmatpush1.msra.mxu0 0.0
  %121 = vmatprep.subr.mxu0 0.0
  %122 = vmatpush1.msra.mxu0 0.0
  %123 = vmatprep.subr.mxu0 0.0
  %124 = vmatpush1.msra.mxu0 0.0
  %125 = vmatprep.subr.mxu0 0.0
  %126 = vmatpush1.msra.mxu0 0.0
  %127 = vmatprep.mubr.f32.mxu0 0.0
  %128 = vmatmul.mubr.f32.gmra.mrb[0].mxu0 %v36
  %v129 = vpop.f32.mrb[0].mxu0
  %v130 = vadd.f32 0.0, %v129
  %v131 = vpop.f32.mrb[0].mxu0
  %132 = vmatprep.mubr.f32.mxu0 0.0
  %133 = vmatmul.mubr.f32.gmra.mrb[0].mxu0 %v39
  %v134 = vpop.f32.mrb[0].mxu0
  %v135 = vadd.f32 0.0, %v134
  %v136 = vpop.f32.mrb[0].mxu0
  %137 = vmatprep.mubr.f32.mxu0 0.0
  %138 = vmatmul.mubr.f32.gmra.mrb[0].mxu0 %v42
  %v139 = vpop.f32.mrb[0].mxu0
  %v140 = vadd.f32 0.0, %v139
  %v141 = vpop.f32.mrb[0].mxu0
  %142 = vmatprep.mubr.f32.mxu0 0.0
  %143 = vmatmul.mubr.f32.gmra.mrb[0].mxu0 %v45
  %v144 = vpop.f32.mrb[0].mxu0
  %v145 = vadd.f32 0.0, %v144
  %v146 = vpop.f32.mrb[0].mxu0
  %147 = vmatprep.mubr.f32.mxu0 0.0
  %148 = vmatmul.mubr.f32.gmra.mrb[0].mxu0 %v48
  %v149 = vpop.f32.mrb[0].mxu0
  %v150 = vadd.f32 0.0, %v149
  %v151 = vpop.f32.mrb[0].mxu0
  %152 = vmatprep.mubr.f32.mxu0 0.0
  %153 = vmatmul.mubr.f32.gmra.mrb[0].mxu0 %v51
  %v154 = vpop.f32.mrb[0].mxu0
  %v155 = vadd.f32 0.0, %v154
  %v156 = vpop.f32.mrb[0].mxu0
  %157 = vmatprep.mubr.f32.mxu0 0.0
  %158 = vmatmul.mubr.f32.gmra.mrb[0].mxu0 %v54
  %v159 = vpop.f32.mrb[0].mxu0
  %v160 = vadd.f32 0.0, %v159
  %v161 = vpop.f32.mrb[0].mxu0
  %162 = vmatprep.mubr.f32.mxu0 0.0
  %163 = vmatmul.mubr.f32.gmra.mrb[0].mxu0 %v57
  %v164 = vpop.f32.mrb[0].mxu0
  %v165 = vadd.f32 0.0, %v164
  %v166 = vpop.f32.mrb[0].mxu0
  %167 = vdwg.mxu0
  %v168 = vld [vmem:[%s2] sm:$0xff]
  %v169 = vld [vmem:[%s2 + $0x8] sm:$0xff]
  %v170 = vld [vmem:[%s2 + $0x10] sm:$0xff]
  %v171 = vld [vmem:[%s2 + $0x18] sm:$0xff]
  %v172 = vld [vmem:[%s2 + $0x20] sm:$0xff]
  %v173 = vld [vmem:[%s2 + $0x28] sm:$0xff]
  %v174 = vld [vmem:[%s2 + $0x30] sm:$0xff]
  %v175 = vld [vmem:[%s2 + $0x38] sm:$0xff]
  %v176 = vld [vmem:[%s2 + $0x40] sm:$0xff]
  %v177 = vld [vmem:[%s2 + $0x48] sm:$0xff]
  %v178 = vld [vmem:[%s2 + $0x50] sm:$0xff]
  %v179 = vld [vmem:[%s2 + $0x58] sm:$0xff]
  %v180 = vld [vmem:[%s2 + $0x60] sm:$0xff]
  %v181 = vld [vmem:[%s2 + $0x68] sm:$0xff]
  %v182 = vld [vmem:[%s2 + $0x70] sm:$0xff]
  %v183 = vld [vmem:[%s2 + $0x78] sm:$0xff]
  %v184 = vld [vmem:[%s2 + $0x80] sm:$0xff]
  %v185 = vld [vmem:[%s2 + $0x88] sm:$0xff]
  %v186 = vld [vmem:[%s2 + $0x90] sm:$0xff]
  %v187 = vld [vmem:[%s2 + $0x98] sm:$0xff]
  %v188 = vld [vmem:[%s2 + $0xa0] sm:$0xff]
  %v189 = vld [vmem:[%s2 + $0xa8] sm:$0xff]
  %v190 = vld [vmem:[%s2 + $0xb0] sm:$0xff]
  %v191 = vld [vmem:[%s2 + $0xb8] sm:$0xff]
  %v192 = vld [vmem:[%s3] sm:$0x1]
  %v193 = vld [vmem:[%s3 + $0x1] sm:$0x1]
  %v194 = vld [vmem:[%s3 + $0x2] sm:$0x1]
  %v203 = vrot.slane %v135, 7
  %vm204 = vcmask 1041409
  %v205 = vsel %vm204, %v203, %v130
  %v206 = vrot.slane %v140, 6
  %vm207 = vcmask 1042434
  %v208 = vsel %vm207, %v206, %v205
  %v209 = vrot.slane %v145, 5
  %vm210 = vcmask 1043459
  %v211 = vsel %vm210, %v209, %v208
  %v212 = vrot.slane %v150, 4
  %vm213 = vcmask 1044484
  %v214 = vsel %vm213, %v212, %v211
  %v215 = vrot.slane %v155, 3
  %vm216 = vcmask 1045509
  %v217 = vsel %vm216, %v215, %v214
  %v218 = vrot.slane %v160, 2
  %vm219 = vcmask 1046534
  %v220 = vsel %vm219, %v218, %v217
  %v221 = vrot.slane %v165, 1
  %vm222 = vcmask 1047559
  %v223 = vsel %vm222, %v221, %v220
  %vm225 = vcmask 261120
  %v226 = vsel %vm225, %v223, 0.0
  %v230 = vlaneseq
  %v231 = vshrl.u32 %v230, 7
  %v232 = vsub.s32 0, %v231
  %v233 = vrot.slane %v192, %v232
  %v234 = vlaneseq
  %v235 = vshrl.u32 %v234, 7
  %v236 = vsub.s32 0, %v235
  %v237 = vrot.slane %v193, %v236
  %v238 = vlaneseq
  %v239 = vshrl.u32 %v238, 7
  %v240 = vsub.s32 0, %v239
  %v241 = vrot.slane %v194, %v240
  %vm245 = vcmask 523264
  %v247 = vsel %vm245, %v226, 0
  %249 = vmatprep.subr.mxu0 0.0
  %250 = vmatpush1.msra.mxu0 %v168
  %251 = vmatprep.subr.mxu0 0.0
  %252 = vmatpush1.msra.mxu0 %v169
  %253 = vmatprep.subr.mxu0 0.0
  %254 = vmatpush1.msra.mxu0 %v170
  %255 = vmatprep.subr.mxu0 0.0
  %256 = vmatpush1.msra.mxu0 %v171
  %257 = vmatprep.subr.mxu0 0.0
  %258 = vmatpush1.msra.mxu0 %v172
  %259 = vmatprep.subr.mxu0 0.0
  %260 = vmatpush1.msra.mxu0 %v173
  %261 = vmatprep.subr.mxu0 0.0
  %262 = vmatpush1.msra.mxu0 %v174
  %263 = vmatprep.subr.mxu0 0.0
  %264 = vmatpush1.msra.mxu0 %v175
  %265 = vmatprep.subr.mxu0 0.0
  %266 = vmatpush1.msra.mxu0 0.0
  %267 = vmatprep.subr.mxu0 0.0
  %268 = vmatpush1.msra.mxu0 0.0
  %269 = vmatprep.subr.mxu0 0.0
  %270 = vmatpush1.msra.mxu0 0.0
  %271 = vmatprep.subr.mxu0 0.0
  %272 = vmatpush1.msra.mxu0 0.0
  %273 = vmatprep.subr.mxu0 0.0
  %274 = vmatpush1.msra.mxu0 0.0
  %275 = vmatprep.subr.mxu0 0.0
  %276 = vmatpush1.msra.mxu0 0.0
  %277 = vmatprep.subr.mxu0 0.0
  %278 = vmatpush1.msra.mxu0 0.0
  %279 = vmatprep.subr.mxu0 0.0
  %280 = vmatpush1.msra.mxu0 0.0
  %281 = vmatprep.subr.mxu0 0.0
  %282 = vmatpush1.msra.mxu0 0.0
  %283 = vmatprep.subr.mxu0 0.0
  %284 = vmatpush1.msra.mxu0 0.0
  %285 = vmatprep.subr.mxu0 0.0
  %286 = vmatpush1.msra.mxu0 0.0
  %287 = vmatprep.subr.mxu0 0.0
  %288 = vmatpush1.msra.mxu0 0.0
  %289 = vmatprep.subr.mxu0 0.0
  %290 = vmatpush1.msra.mxu0 0.0
  %291 = vmatprep.subr.mxu0 0.0
  %292 = vmatpush1.msra.mxu0 0.0
  %293 = vmatprep.subr.mxu0 0.0
  %294 = vmatpush1.msra.mxu0 0.0
  %295 = vmatprep.subr.mxu0 0.0
  %296 = vmatpush1.msra.mxu0 0.0
  %297 = vmatprep.subr.mxu0 0.0
  %298 = vmatpush1.msra.mxu0 0.0
  %299 = vmatprep.subr.mxu0 0.0
  %300 = vmatpush1.msra.mxu0 0.0
  %301 = vmatprep.subr.mxu0 0.0
  %302 = vmatpush1.msra.mxu0 0.0
  %303 = vmatprep.subr.mxu0 0.0
  %304 = vmatpush1.msra.mxu0 0.0
  %305 = vmatprep.subr.mxu0 0.0
  %306 = vmatpush1.msra.mxu0 0.0
  %307 = vmatprep.subr.mxu0 0.0
  %308 = vmatpush1.msra.mxu0 0.0
  %309 = vmatprep.subr.mxu0 0.0
  %310 = vmatpush1.msra.mxu0 0.0
  %311 = vmatprep.subr.mxu0 0.0
  %312 = vmatpush1.msra.mxu0 0.0
  %313 = vmatprep.mubr.f32.mxu0 0.0
  %314 = vmatmul.mubr.f32.gmra.mrb[0].mxu0 %v247
  %v315 = vpop.f32.mrb[0].mxu0
  %v316 = vadd.f32 %v233, %v315
  %v317 = vpop.f32.mrb[0].mxu0
  %318 = vdwg.mxu0
  %v319 = vtanh.pop %v316
  %v320 = vsel %vm207, %v203, %v130
  %v321 = vsel %vm210, %v206, %v320
  %v322 = vsel %vm213, %v209, %v321
  %v323 = vsel %vm216, %v212, %v322
  %v324 = vsel %vm219, %v215, %v323
  %v325 = vsel %vm222, %v218, %v324
  %v329 = vrot.slane %v319, 7
  %330 = vrot.lane.b32.xlu0 %v329, 32
  %v331 = vpop.permute.xlu0 %330
  %v333 = vsel %vm225, %v325, %v331
  %v334 = vsel %vm225, %v221, %v331
  %v335 = vsel %vm225, %v319, 0.0
  %v337 = vrot.slane %v335, 7
  %vm340 = vcmask 1046528
  %v341 = vrot.slane %v333, 1
  %v342 = vrot.slane %v334, 1
  %v343 = vsel %vm340, %v341, %v342
  %v344 = vsel %vm245, %v343, 0
  %346 = vmatprep.subr.mxu0 0.0
  %347 = vmatpush1.msra.mxu0 %v168
  %348 = vmatprep.subr.mxu0 0.0
  %349 = vmatpush1.msra.mxu0 %v169
  %350 = vmatprep.subr.mxu0 0.0
  %351 = vmatpush1.msra.mxu0 %v170
  %352 = vmatprep.subr.mxu0 0.0
  %353 = vmatpush1.msra.mxu0 %v171
  %354 = vmatprep.subr.mxu0 0.0
  %355 = vmatpush1.msra.mxu0 %v172
  %356 = vmatprep.subr.mxu0 0.0
  %357 = vmatpush1.msra.mxu0 %v173
  %358 = vmatprep.subr.mxu0 0.0
  %359 = vmatpush1.msra.mxu0 %v174
  %360 = vmatprep.subr.mxu0 0.0
  %361 = vmatpush1.msra.mxu0 %v175
  %362 = vmatprep.subr.mxu0 0.0
  %363 = vmatpush1.msra.mxu0 0.0
  %364 = vmatprep.subr.mxu0 0.0
  %365 = vmatpush1.msra.mxu0 0.0
  %366 = vmatprep.subr.mxu0 0.0
  %367 = vmatpush1.msra.mxu0 0.0
  %368 = vmatprep.subr.mxu0 0.0
  %369 = vmatpush1.msra.mxu0 0.0
  %370 = vmatprep.subr.mxu0 0.0
  %371 = vmatpush1.msra.mxu0 0.0
  %372 = vmatprep.subr.mxu0 0.0
  %373 = vmatpush1.msra.mxu0 0.0
  %374 = vmatprep.subr.mxu0 0.0
  %375 = vmatpush1.msra.mxu0 0.0
  %376 = vmatprep.subr.mxu0 0.0
  %377 = vmatpush1.msra.mxu0 0.0
  %378 = vmatprep.subr.mxu0 0.0
  %379 = vmatpush1.msra.mxu0 0.0
  %380 = vmatprep.subr.mxu0 0.0
  %381 = vmatpush1.msra.mxu0 0.0
  %382 = vmatprep.subr.mxu0 0.0
  %383 = vmatpush1.msra.mxu0 0.0
  %384 = vmatprep.subr.mxu0 0.0
  %385 = vmatpush1.msra.mxu0 0.0
  %386 = vmatprep.subr.mxu0 0.0
  %387 = vmatpush1.msra.mxu0 0.0
  %388 = vmatprep.subr.mxu0 0.0
  %389 = vmatpush1.msra.mxu0 0.0
  %390 = vmatprep.subr.mxu0 0.0
  %391 = vmatpush1.msra.mxu0 0.0
  %392 = vmatprep.subr.mxu0 0.0
  %393 = vmatpush1.msra.mxu0 0.0
  %394 = vmatprep.subr.mxu0 0.0
  %395 = vmatpush1.msra.mxu0 0.0
  %396 = vmatprep.subr.mxu0 0.0
  %397 = vmatpush1.msra.mxu0 0.0
  %398 = vmatprep.subr.mxu0 0.0
  %399 = vmatpush1.msra.mxu0 0.0
  %400 = vmatprep.subr.mxu0 0.0
  %401 = vmatpush1.msra.mxu0 0.0
  %402 = vmatprep.subr.mxu0 0.0
  %403 = vmatpush1.msra.mxu0 0.0
  %404 = vmatprep.subr.mxu0 0.0
  %405 = vmatpush1.msra.mxu0 0.0
  %406 = vmatprep.subr.mxu0 0.0
  %407 = vmatpush1.msra.mxu0 0.0
  %408 = vmatprep.subr.mxu0 0.0
  %409 = vmatpush1.msra.mxu0 0.0
  %410 = vmatprep.mubr.f32.mxu0 0.0
  %411 = vmatmul.mubr.f32.gmra.mrb[0].mxu0 %v344
  %v412 = vpop.f32.mrb[0].mxu0
  %v413 = vadd.f32 %v233, %v412
  %v414 = vpop.f32.mrb[0].mxu0
  %415 = vdwg.mxu0
  %v416 = vrot.slane %v337, 1
  %v417 = vsel %vm340, %v416, %v416
  %v418 = vsel %vm245, %v417, 0
  %420 = vmatprep.subr.mxu0 0.0
  %421 = vmatpush1.msra.mxu0 %v176
  %422 = vmatprep.subr.mxu0 0.0
  %423 = vmatpush1.msra.mxu0 %v177
  %424 = vmatprep.subr.mxu0 0.0
  %425 = vmatpush1.msra.mxu0 %v178
  %426 = vmatprep.subr.mxu0 0.0
  %427 = vmatpush1.msra.mxu0 %v179
  %428 = vmatprep.subr.mxu0 0.0
  %429 = vmatpush1.msra.mxu0 %v180
  %430 = vmatprep.subr.mxu0 0.0
  %431 = vmatpush1.msra.mxu0 %v181
  %432 = vmatprep.subr.mxu0 0.0
  %433 = vmatpush1.msra.mxu0 %v182
  %434 = vmatprep.subr.mxu0 0.0
  %435 = vmatpush1.msra.mxu0 %v183
  %436 = vmatprep.subr.mxu0 0.0
  %437 = vmatpush1.msra.mxu0 0.0
  %438 = vmatprep.subr.mxu0 0.0
  %439 = vmatpush1.msra.mxu0 0.0
  %440 = vmatprep.subr.mxu0 0.0
  %441 = vmatpush1.msra.mxu0 0.0
  %442 = vmatprep.subr.mxu0 0.0
  %443 = vmatpush1.msra.mxu0 0.0
  %444 = vmatprep.subr.mxu0 0.0
  %445 = vmatpush1.msra.mxu0 0.0
  %446 = vmatprep.subr.mxu0 0.0
  %447 = vmatpush1.msra.mxu0 0.0
  %448 = vmatprep.subr.mxu0 0.0
  %449 = vmatpush1.msra.mxu0 0.0
  %450 = vmatprep.subr.mxu0 0.0
  %451 = vmatpush1.msra.mxu0 0.0
  %452 = vmatprep.subr.mxu0 0.0
  %453 = vmatpush1.msra.mxu0 0.0
  %454 = vmatprep.subr.mxu0 0.0
  %455 = vmatpush1.msra.mxu0 0.0
  %456 = vmatprep.subr.mxu0 0.0
  %457 = vmatpush1.msra.mxu0 0.0
  %458 = vmatprep.subr.mxu0 0.0
  %459 = vmatpush1.msra.mxu0 0.0
  %460 = vmatprep.subr.mxu0 0.0
  %461 = vmatpush1.msra.mxu0 0.0
  %462 = vmatprep.subr.mxu0 0.0
  %463 = vmatpush1.msra.mxu0 0.0
  %464 = vmatprep.subr.mxu0 0.0
  %465 = vmatpush1.msra.mxu0 0.0
  %466 = vmatprep.subr.mxu0 0.0
  %467 = vmatpush1.msra.mxu0 0.0
  %468 = vmatprep.subr.mxu0 0.0
  %469 = vmatpush1.msra.mxu0 0.0
  %470 = vmatprep.subr.mxu0 0.0
  %471 = vmatpush1.msra.mxu0 0.0
  %472 = vmatprep.subr.mxu0 0.0
  %473 = vmatpush1.msra.mxu0 0.0
  %474 = vmatprep.subr.mxu0 0.0
  %475 = vmatpush1.msra.mxu0 0.0
  %476 = vmatprep.subr.mxu0 0.0
  %477 = vmatpush1.msra.mxu0 0.0
  %478 = vmatprep.subr.mxu0 0.0
  %479 = vmatpush1.msra.mxu0 0.0
  %480 = vmatprep.subr.mxu0 0.0
  %481 = vmatpush1.msra.mxu0 0.0
  %482 = vmatprep.subr.mxu0 0.0
  %483 = vmatpush1.msra.mxu0 0.0
  %484 = vmatprep.mubr.f32.mxu0 0.0
  %485 = vmatmul.mubr.f32.gmra.mrb[0].mxu0 %v418
  %v486 = vpop.f32.mrb[0].mxu0
  %v487 = vadd.f32 %v237, %v486
  %v488 = vpop.f32.mrb[0].mxu0
  %489 = vdwg.mxu0
  %v490 = vtanh.pop %v413
  %v491 = vtanh.pop %v487
  %v492 = vsel %vm210, %v203, %v130
  %v493 = vsel %vm213, %v206, %v492
  %v494 = vsel %vm216, %v209, %v493
  %v495 = vsel %vm219, %v212, %v494
  %v496 = vsel %vm222, %v215, %v495
  %v497 = vsel %vm204, %v221, %v218
  %v501 = vrot.slane %v490, 6
  %502 = vrot.lane.b32.xlu0 %v501, 32
  %v503 = vpop.permute.xlu0 %502
  %v505 = vsel %vm225, %v496, %v503
  %v506 = vsel %vm225, %v497, %v503
  %508 = vrot.lane.b32.xlu0 %v491, 32
  %v509 = vpop.permute.xlu0 %508
  %v511 = vsel %vm225, %v490, %v509
  %v512 = vsel %vm225, %v491, 0.0
  %v514 = vrot.slane %v511, 6
  %v516 = vrot.slane %v512, 6
  %vm519 = vcmask 1045504
  %v520 = vrot.slane %v505, 2
  %v521 = vrot.slane %v506, 2
  %v522 = vsel %vm519, %v520, %v521
  %v523 = vsel %vm245, %v522, 0
  %525 = vmatprep.subr.mxu0 0.0
  %526 = vmatpush1.msra.mxu0 %v168
  %527 = vmatprep.subr.mxu0 0.0
  %528 = vmatpush1.msra.mxu0 %v169
  %529 = vmatprep.subr.mxu0 0.0
  %530 = vmatpush1.msra.mxu0 %v170
  %531 = vmatprep.subr.mxu0 0.0
  %532 = vmatpush1.msra.mxu0 %v171
  %533 = vmatprep.subr.mxu0 0.0
  %534 = vmatpush1.msra.mxu0 %v172
  %535 = vmatprep.subr.mxu0 0.0
  %536 = vmatpush1.msra.mxu0 %v173
  %537 = vmatprep.subr.mxu0 0.0
  %538 = vmatpush1.msra.mxu0 %v174
  %539 = vmatprep.subr.mxu0 0.0
  %540 = vmatpush1.msra.mxu0 %v175
  %541 = vmatprep.subr.mxu0 0.0
  %542 = vmatpush1.msra.mxu0 0.0
  %543 = vmatprep.subr.mxu0 0.0
  %544 = vmatpush1.msra.mxu0 0.0
  %545 = vmatprep.subr.mxu0 0.0
  %546 = vmatpush1.msra.mxu0 0.0
  %547 = vmatprep.subr.mxu0 0.0
  %548 = vmatpush1.msra.mxu0 0.0
  %549 = vmatprep.subr.mxu0 0.0
  %550 = vmatpush1.msra.mxu0 0.0
  %551 = vmatprep.subr.mxu0 0.0
  %552 = vmatpush1.msra.mxu0 0.0
  %553 = vmatprep.subr.mxu0 0.0
  %554 = vmatpush1.msra.mxu0 0.0
  %555 = vmatprep.subr.mxu0 0.0
  %556 = vmatpush1.msra.mxu0 0.0
  %557 = vmatprep.subr.mxu0 0.0
  %558 = vmatpush1.msra.mxu0 0.0
  %559 = vmatprep.subr.mxu0 0.0
  %560 = vmatpush1.msra.mxu0 0.0
  %561 = vmatprep.subr.mxu0 0.0
  %562 = vmatpush1.msra.mxu0 0.0
  %563 = vmatprep.subr.mxu0 0.0
  %564 = vmatpush1.msra.mxu0 0.0
  %565 = vmatprep.subr.mxu0 0.0
  %566 = vmatpush1.msra.mxu0 0.0
  %567 = vmatprep.subr.mxu0 0.0
  %568 = vmatpush1.msra.mxu0 0.0
  %569 = vmatprep.subr.mxu0 0.0
  %570 = vmatpush1.msra.mxu0 0.0
  %571 = vmatprep.subr.mxu0 0.0
  %572 = vmatpush1.msra.mxu0 0.0
  %573 = vmatprep.subr.mxu0 0.0
  %574 = vmatpush1.msra.mxu0 0.0
  %575 = vmatprep.subr.mxu0 0.0
  %576 = vmatpush1.msra.mxu0 0.0
  %577 = vmatprep.subr.mxu0 0.0
  %578 = vmatpush1.msra.mxu0 0.0
  %579 = vmatprep.subr.mxu0 0.0
  %580 = vmatpush1.msra.mxu0 0.0
  %581 = vmatprep.subr.mxu0 0.0
  %582 = vmatpush1.msra.mxu0 0.0
  %583 = vmatprep.subr.mxu0 0.0
  %584 = vmatpush1.msra.mxu0 0.0
  %585 = vmatprep.subr.mxu0 0.0
  %586 = vmatpush1.msra.mxu0 0.0
  %587 = vmatprep.subr.mxu0 0.0
  %588 = vmatpush1.msra.mxu0 0.0
  %589 = vmatprep.mubr.f32.mxu0 0.0
  %590 = vmatmul.mubr.f32.gmra.mrb[0].mxu0 %v523
  %v591 = vpop.f32.mrb[0].mxu0
  %v592 = vadd.f32 %v233, %v591
  %v593 = vpop.f32.mrb[0].mxu0
  %594 = vdwg.mxu0
  %v595 = vrot.slane %v514, 2
  %v596 = vsel %vm519, %v595, %v595
  %v597 = vsel %vm245, %v596, 0
  %599 = vmatprep.subr.mxu0 0.0
  %600 = vmatpush1.msra.mxu0 %v176
  %601 = vmatprep.subr.mxu0 0.0
  %602 = vmatpush1.msra.mxu0 %v177
  %603 = vmatprep.subr.mxu0 0.0
  %604 = vmatpush1.msra.mxu0 %v178
  %605 = vmatprep.subr.mxu0 0.0
  %606 = vmatpush1.msra.mxu0 %v179
  %607 = vmatprep.subr.mxu0 0.0
  %608 = vmatpush1.msra.mxu0 %v180
  %609 = vmatprep.subr.mxu0 0.0
  %610 = vmatpush1.msra.mxu0 %v181
  %611 = vmatprep.subr.mxu0 0.0
  %612 = vmatpush1.msra.mxu0 %v182
  %613 = vmatprep.subr.mxu0 0.0
  %614 = vmatpush1.msra.mxu0 %v183
  %615 = vmatprep.subr.mxu0 0.0
  %616 = vmatpush1.msra.mxu0 0.0
  %617 = vmatprep.subr.mxu0 0.0
  %618 = vmatpush1.msra.mxu0 0.0
  %619 = vmatprep.subr.mxu0 0.0
  %620 = vmatpush1.msra.mxu0 0.0
  %621 = vmatprep.subr.mxu0 0.0
  %622 = vmatpush1.msra.mxu0 0.0
  %623 = vmatprep.subr.mxu0 0.0
  %624 = vmatpush1.msra.mxu0 0.0
  %625 = vmatprep.subr.mxu0 0.0
  %626 = vmatpush1.msra.mxu0 0.0
  %627 = vmatprep.subr.mxu0 0.0
  %628 = vmatpush1.msra.mxu0 0.0
  %629 = vmatprep.subr.mxu0 0.0
  %630 = vmatpush1.msra.mxu0 0.0
  %631 = vmatprep.subr.mxu0 0.0
  %632 = vmatpush1.msra.mxu0 0.0
  %633 = vmatprep.subr.mxu0 0.0
  %634 = vmatpush1.msra.mxu0 0.0
  %635 = vmatprep.subr.mxu0 0.0
  %636 = vmatpush1.msra.mxu0 0.0
  %637 = vmatprep.subr.mxu0 0.0
  %638 = vmatpush1.msra.mxu0 0.0
  %639 = vmatprep.subr.mxu0 0.0
  %640 = vmatpush1.msra.mxu0 0.0
  %641 = vmatprep.subr.mxu0 0.0
  %642 = vmatpush1.msra.mxu0 0.0
  %643 = vmatprep.subr.mxu0 0.0
  %644 = vmatpush1.msra.mxu0 0.0
  %645 = vmatprep.subr.mxu0 0.0
  %646 = vmatpush1.msra.mxu0 0.0
  %647 = vmatprep.subr.mxu0 0.0
  %648 = vmatpush1.msra.mxu0 0.0
  %649 = vmatprep.subr.mxu0 0.0
  %650 = vmatpush1.msra.mxu0 0.0
  %651 = vmatprep.subr.mxu0 0.0
  %652 = vmatpush1.msra.mxu0 0.0
  %653 = vmatprep.subr.mxu0 0.0
  %654 = vmatpush1.msra.mxu0 0.0
  %655 = vmatprep.subr.mxu0 0.0
  %656 = vmatpush1.msra.mxu0 0.0
  %657 = vmatprep.subr.mxu0 0.0
  %658 = vmatpush1.msra.mxu0 0.0
  %659 = vmatprep.subr.mxu0 0.0
  %660 = vmatpush1.msra.mxu0 0.0
  %661 = vmatprep.subr.mxu0 0.0
  %662 = vmatpush1.msra.mxu0 0.0
  %663 = vmatprep.mubr.f32.mxu0 0.0
  %664 = vmatmul.mubr.f32.gmra.mrb[0].mxu0 %v597
  %v665 = vpop.f32.mrb[0].mxu0
  %v666 = vadd.f32 %v237, %v665
  %v667 = vpop.f32.mrb[0].mxu0
  %668 = vdwg.mxu0
  %v669 = vrot.slane %v516, 2
  %v670 = vsel %vm519, %v669, %v669
  %v671 = vsel %vm245, %v670, 0
  %673 = vmatprep.subr.mxu0 0.0
  %674 = vmatpush1.msra.mxu0 %v184
  %675 = vmatprep.subr.mxu0 0.0
  %676 = vmatpush1.msra.mxu0 %v185
  %677 = vmatprep.subr.mxu0 0.0
  %678 = vmatpush1.msra.mxu0 %v186
  %679 = vmatprep.subr.mxu0 0.0
  %680 = vmatpush1.msra.mxu0 %v187
  %681 = vmatprep.subr.mxu0 0.0
  %682 = vmatpush1.msra.mxu0 %v188
  %683 = vmatprep.subr.mxu0 0.0
  %684 = vmatpush1.msra.mxu0 %v189
  %685 = vmatprep.subr.mxu0 0.0
  %686 = vmatpush1.msra.mxu0 %v190
  %687 = vmatprep.subr.mxu0 0.0
  %688 = vmatpush1.msra.mxu0 %v191
  %689 = vmatprep.subr.mxu0 0.0
  %690 = vmatpush1.msra.mxu0 0.0
  %691 = vmatprep.subr.mxu0 0.0
  %692 = vmatpush1.msra.mxu0 0.0
  %693 = vmatprep.subr.mxu0 0.0
  %694 = vmatpush1.msra.mxu0 0.0
  %695 = vmatprep.subr.mxu0 0.0
  %696 = vmatpush1.msra.mxu0 0.0
  %697 = vmatprep.subr.mxu0 0.0
  %698 = vmatpush1.msra.mxu0 0.0
  %699 = vmatprep.subr.mxu0 0.0
  %700 = vmatpush1.msra.mxu0 0.0
  %701 = vmatprep.subr.mxu0 0.0
  %702 = vmatpush1.msra.mxu0 0.0
  %703 = vmatprep.subr.mxu0 0.0
  %704 = vmatpush1.msra.mxu0 0.0
  %705 = vmatprep.subr.mxu0 0.0
  %706 = vmatpush1.msra.mxu0 0.0
  %707 = vmatprep.subr.mxu0 0.0
  %708 = vmatpush1.msra.mxu0 0.0
  %709 = vmatprep.subr.mxu0 0.0
  %710 = vmatpush1.msra.mxu0 0.0
  %711 = vmatprep.subr.mxu0 0.0
  %712 = vmatpush1.msra.mxu0 0.0
  %713 = vmatprep.subr.mxu0 0.0
  %714 = vmatpush1.msra.mxu0 0.0
  %715 = vmatprep.subr.mxu0 0.0
  %716 = vmatpush1.msra.mxu0 0.0
  %717 = vmatprep.subr.mxu0 0.0
  %718 = vmatpush1.msra.mxu0 0.0
  %719 = vmatprep.subr.mxu0 0.0
  %720 = vmatpush1.msra.mxu0 0.0
  %721 = vmatprep.subr.mxu0 0.0
  %722 = vmatpush1.msra.mxu0 0.0
  %723 = vmatprep.subr.mxu0 0.0
  %724 = vmatpush1.msra.mxu0 0.0
  %725 = vmatprep.subr.mxu0 0.0
  %726 = vmatpush1.msra.mxu0 0.0
  %727 = vmatprep.subr.mxu0 0.0
  %728 = vmatpush1.msra.mxu0 0.0
  %729 = vmatprep.subr.mxu0 0.0
  %730 = vmatpush1.msra.mxu0 0.0
  %731 = vmatprep.subr.mxu0 0.0
  %732 = vmatpush1.msra.mxu0 0.0
  %733 = vmatprep.subr.mxu0 0.0
  %734 = vmatpush1.msra.mxu0 0.0
  %735 = vmatprep.subr.mxu0 0.0
  %736 = vmatpush1.msra.mxu0 0.0
  %737 = vmatprep.mubr.f32.mxu0 0.0
  %738 = vmatmul.mubr.f32.gmra.mrb[0].mxu0 %v671
  %v739 = vpop.f32.mrb[0].mxu0
  %v740 = vadd.f32 %v241, %v739
  %v741 = vpop.f32.mrb[0].mxu0
  %742 = vdwg.mxu0
  %v743 = vtanh.pop %v592
  %v744 = vtanh.pop %v666
  %v745 = vtanh.pop %v740
  %v746 = vsel %vm213, %v203, %v130
  %v747 = vsel %vm216, %v206, %v746
  %v748 = vsel %vm219, %v209, %v747
  %v749 = vsel %vm222, %v212, %v748
  %v750 = vsel %vm204, %v218, %v215
  %v751 = vsel %vm207, %v221, %v750
  %v755 = vrot.slane %v743, 5
  %756 = vrot.lane.b32.xlu0 %v755, 32
  %v757 = vpop.permute.xlu0 %756
  %v759 = vsel %vm225, %v749, %v757
  %v760 = vsel %vm225, %v751, %v757
  %762 = vrot.lane.b32.xlu0 %v744, 32
  %v763 = vpop.permute.xlu0 %762
  %v765 = vsel %vm225, %v743, %v763
  %767 = vrot.lane.b32.xlu0 %v745, 32
  %v768 = vpop.permute.xlu0 %767
  %v770 = vsel %vm225, %v744, %v768
  %v772 = vrot.slane %v765, 5
  %v774 = vrot.slane %v770, 5
  %vm777 = vcmask 1044480
  %v778 = vrot.slane %v759, 3
  %v779 = vrot.slane %v760, 3
  %v780 = vsel %vm777, %v778, %v779
  %v781 = vsel %vm245, %v780, 0
  %783 = vmatprep.subr.mxu0 0.0
  %784 = vmatpush1.msra.mxu0 %v168
  %785 = vmatprep.subr.mxu0 0.0
  %786 = vmatpush1.msra.mxu0 %v169
  %787 = vmatprep.subr.mxu0 0.0
  %788 = vmatpush1.msra.mxu0 %v170
  %789 = vmatprep.subr.mxu0 0.0
  %790 = vmatpush1.msra.mxu0 %v171
  %791 = vmatprep.subr.mxu0 0.0
  %792 = vmatpush1.msra.mxu0 %v172
  %793 = vmatprep.subr.mxu0 0.0
  %794 = vmatpush1.msra.mxu0 %v173
  %795 = vmatprep.subr.mxu0 0.0
  %796 = vmatpush1.msra.mxu0 %v174
  %797 = vmatprep.subr.mxu0 0.0
  %798 = vmatpush1.msra.mxu0 %v175
  %799 = vmatprep.subr.mxu0 0.0
  %800 = vmatpush1.msra.mxu0 0.0
  %801 = vmatprep.subr.mxu0 0.0
  %802 = vmatpush1.msra.mxu0 0.0
  %803 = vmatprep.subr.mxu0 0.0
  %804 = vmatpush1.msra.mxu0 0.0
  %805 = vmatprep.subr.mxu0 0.0
  %806 = vmatpush1.msra.mxu0 0.0
  %807 = vmatprep.subr.mxu0 0.0
  %808 = vmatpush1.msra.mxu0 0.0
  %809 = vmatprep.subr.mxu0 0.0
  %810 = vmatpush1.msra.mxu0 0.0
  %811 = vmatprep.subr.mxu0 0.0
  %812 = vmatpush1.msra.mxu0 0.0
  %813 = vmatprep.subr.mxu0 0.0
  %814 = vmatpush1.msra.mxu0 0.0
  %815 = vmatprep.subr.mxu0 0.0
  %816 = vmatpush1.msra.mxu0 0.0
  %817 = vmatprep.subr.mxu0 0.0
  %818 = vmatpush1.msra.mxu0 0.0
  %819 = vmatprep.subr.mxu0 0.0
  %820 = vmatpush1.msra.mxu0 0.0
  %821 = vmatprep.subr.mxu0 0.0
  %822 = vmatpush1.msra.mxu0 0.0
  %823 = vmatprep.subr.mxu0 0.0
  %824 = vmatpush1.msra.mxu0 0.0
  %825 = vmatprep.subr.mxu0 0.0
  %826 = vmatpush1.msra.mxu0 0.0
  %827 = vmatprep.subr.mxu0 0.0
  %828 = vmatpush1.msra.mxu0 0.0
  %829 = vmatprep.subr.mxu0 0.0
  %830 = vmatpush1.msra.mxu0 0.0
  %831 = vmatprep.subr.mxu0 0.0
  %832 = vmatpush1.msra.mxu0 0.0
  %833 = vmatprep.subr.mxu0 0.0
  %834 = vmatpush1.msra.mxu0 0.0
  %835 = vmatprep.subr.mxu0 0.0
  %836 = vmatpush1.msra.mxu0 0.0
  %837 = vmatprep.subr.mxu0 0.0
  %838 = vmatpush1.msra.mxu0 0.0
  %839 = vmatprep.subr.mxu0 0.0
  %840 = vmatpush1.msra.mxu0 0.0
  %841 = vmatprep.subr.mxu0 0.0
  %842 = vmatpush1.msra.mxu0 0.0
  %843 = vmatprep.subr.mxu0 0.0
  %844 = vmatpush1.msra.mxu0 0.0
  %845 = vmatprep.subr.mxu0 0.0
  %846 = vmatpush1.msra.mxu0 0.0
  %847 = vmatprep.mubr.f32.mxu0 0.0
  %848 = vmatmul.mubr.f32.gmra.mrb[0].mxu0 %v781
  %v849 = vpop.f32.mrb[0].mxu0
  %v850 = vadd.f32 %v233, %v849
  %v851 = vpop.f32.mrb[0].mxu0
  %852 = vdwg.mxu0
  %v853 = vrot.slane %v772, 3
  %v854 = vsel %vm777, %v853, %v853
  %v855 = vsel %vm245, %v854, 0
  %857 = vmatprep.subr.mxu0 0.0
  %858 = vmatpush1.msra.mxu0 %v176
  %859 = vmatprep.subr.mxu0 0.0
  %860 = vmatpush1.msra.mxu0 %v177
  %861 = vmatprep.subr.mxu0 0.0
  %862 = vmatpush1.msra.mxu0 %v178
  %863 = vmatprep.subr.mxu0 0.0
  %864 = vmatpush1.msra.mxu0 %v179
  %865 = vmatprep.subr.mxu0 0.0
  %866 = vmatpush1.msra.mxu0 %v180
  %867 = vmatprep.subr.mxu0 0.0
  %868 = vmatpush1.msra.mxu0 %v181
  %869 = vmatprep.subr.mxu0 0.0
  %870 = vmatpush1.msra.mxu0 %v182
  %871 = vmatprep.subr.mxu0 0.0
  %872 = vmatpush1.msra.mxu0 %v183
  %873 = vmatprep.subr.mxu0 0.0
  %874 = vmatpush1.msra.mxu0 0.0
  %875 = vmatprep.subr.mxu0 0.0
  %876 = vmatpush1.msra.mxu0 0.0
  %877 = vmatprep.subr.mxu0 0.0
  %878 = vmatpush1.msra.mxu0 0.0
  %879 = vmatprep.subr.mxu0 0.0
  %880 = vmatpush1.msra.mxu0 0.0
  %881 = vmatprep.subr.mxu0 0.0
  %882 = vmatpush1.msra.mxu0 0.0
  %883 = vmatprep.subr.mxu0 0.0
  %884 = vmatpush1.msra.mxu0 0.0
  %885 = vmatprep.subr.mxu0 0.0
  %886 = vmatpush1.msra.mxu0 0.0
  %887 = vmatprep.subr.mxu0 0.0
  %888 = vmatpush1.msra.mxu0 0.0
  %889 = vmatprep.subr.mxu0 0.0
  %890 = vmatpush1.msra.mxu0 0.0
  %891 = vmatprep.subr.mxu0 0.0
  %892 = vmatpush1.msra.mxu0 0.0
  %893 = vmatprep.subr.mxu0 0.0
  %894 = vmatpush1.msra.mxu0 0.0
  %895 = vmatprep.subr.mxu0 0.0
  %896 = vmatpush1.msra.mxu0 0.0
  %897 = vmatprep.subr.mxu0 0.0
  %898 = vmatpush1.msra.mxu0 0.0
  %899 = vmatprep.subr.mxu0 0.0
  %900 = vmatpush1.msra.mxu0 0.0
  %901 = vmatprep.subr.mxu0 0.0
  %902 = vmatpush1.msra.mxu0 0.0
  %903 = vmatprep.subr.mxu0 0.0
  %904 = vmatpush1.msra.mxu0 0.0
  %905 = vmatprep.subr.mxu0 0.0
  %906 = vmatpush1.msra.mxu0 0.0
  %907 = vmatprep.subr.mxu0 0.0
  %908 = vmatpush1.msra.mxu0 0.0
  %909 = vmatprep.subr.mxu0 0.0
  %910 = vmatpush1.msra.mxu0 0.0
  %911 = vmatprep.subr.mxu0 0.0
  %912 = vmatpush1.msra.mxu0 0.0
  %913 = vmatprep.subr.mxu0 0.0
  %914 = vmatpush1.msra.mxu0 0.0
  %915 = vmatprep.subr.mxu0 0.0
  %916 = vmatpush1.msra.mxu0 0.0
  %917 = vmatprep.subr.mxu0 0.0
  %918 = vmatpush1.msra.mxu0 0.0
  %919 = vmatprep.subr.mxu0 0.0
  %920 = vmatpush1.msra.mxu0 0.0
  %921 = vmatprep.mubr.f32.mxu0 0.0
  %922 = vmatmul.mubr.f32.gmra.mrb[0].mxu0 %v855
  %v923 = vpop.f32.mrb[0].mxu0
  %v924 = vadd.f32 %v237, %v923
  %v925 = vpop.f32.mrb[0].mxu0
  %926 = vdwg.mxu0
  %v927 = vrot.slane %v774, 3
  %v928 = vsel %vm777, %v927, %v927
  %v929 = vsel %vm245, %v928, 0
  %931 = vmatprep.subr.mxu0 0.0
  %932 = vmatpush1.msra.mxu0 %v184
  %933 = vmatprep.subr.mxu0 0.0
  %934 = vmatpush1.msra.mxu0 %v185
  %935 = vmatprep.subr.mxu0 0.0
  %936 = vmatpush1.msra.mxu0 %v186
  %937 = vmatprep.subr.mxu0 0.0
  %938 = vmatpush1.msra.mxu0 %v187
  %939 = vmatprep.subr.mxu0 0.0
  %940 = vmatpush1.msra.mxu0 %v188
  %941 = vmatprep.subr.mxu0 0.0
  %942 = vmatpush1.msra.mxu0 %v189
  %943 = vmatprep.subr.mxu0 0.0
  %944 = vmatpush1.msra.mxu0 %v190
  %945 = vmatprep.subr.mxu0 0.0
  %946 = vmatpush1.msra.mxu0 %v191
  %947 = vmatprep.subr.mxu0 0.0
  %948 = vmatpush1.msra.mxu0 0.0
  %949 = vmatprep.subr.mxu0 0.0
  %950 = vmatpush1.msra.mxu0 0.0
  %951 = vmatprep.subr.mxu0 0.0
  %952 = vmatpush1.msra.mxu0 0.0
  %953 = vmatprep.subr.mxu0 0.0
  %954 = vmatpush1.msra.mxu0 0.0
  %955 = vmatprep.subr.mxu0 0.0
  %956 = vmatpush1.msra.mxu0 0.0
  %957 = vmatprep.subr.mxu0 0.0
  %958 = vmatpush1.msra.mxu0 0.0
  %959 = vmatprep.subr.mxu0 0.0
  %960 = vmatpush1.msra.mxu0 0.0
  %961 = vmatprep.subr.mxu0 0.0
  %962 = vmatpush1.msra.mxu0 0.0
  %963 = vmatprep.subr.mxu0 0.0
  %964 = vmatpush1.msra.mxu0 0.0
  %965 = vmatprep.subr.mxu0 0.0
  %966 = vmatpush1.msra.mxu0 0.0
  %967 = vmatprep.subr.mxu0 0.0
  %968 = vmatpush1.msra.mxu0 0.0
  %969 = vmatprep.subr.mxu0 0.0
  %970 = vmatpush1.msra.mxu0 0.0
  %971 = vmatprep.subr.mxu0 0.0
  %972 = vmatpush1.msra.mxu0 0.0
  %973 = vmatprep.subr.mxu0 0.0
  %974 = vmatpush1.msra.mxu0 0.0
  %975 = vmatprep.subr.mxu0 0.0
  %976 = vmatpush1.msra.mxu0 0.0
  %977 = vmatprep.subr.mxu0 0.0
  %978 = vmatpush1.msra.mxu0 0.0
  %979 = vmatprep.subr.mxu0 0.0
  %980 = vmatpush1.msra.mxu0 0.0
  %981 = vmatprep.subr.mxu0 0.0
  %982 = vmatpush1.msra.mxu0 0.0
  %983 = vmatprep.subr.mxu0 0.0
  %984 = vmatpush1.msra.mxu0 0.0
  %985 = vmatprep.subr.mxu0 0.0
  %986 = vmatpush1.msra.mxu0 0.0
  %987 = vmatprep.subr.mxu0 0.0
  %988 = vmatpush1.msra.mxu0 0.0
  %989 = vmatprep.subr.mxu0 0.0
  %990 = vmatpush1.msra.mxu0 0.0
  %991 = vmatprep.subr.mxu0 0.0
  %992 = vmatpush1.msra.mxu0 0.0
  %993 = vmatprep.subr.mxu0 0.0
  %994 = vmatpush1.msra.mxu0 0.0
  %995 = vmatprep.mubr.f32.mxu0 0.0
  %996 = vmatmul.mubr.f32.gmra.mrb[0].mxu0 %v929
  %v997 = vpop.f32.mrb[0].mxu0
  %v998 = vadd.f32 %v241, %v997
  %v999 = vpop.f32.mrb[0].mxu0
  %1000 = vdwg.mxu0
  %v1001 = vtanh.pop %v850
  %v1002 = vtanh.pop %v924
  %v1003 = vtanh.pop %v998
  %v1004 = vsel %vm216, %v203, %v130
  %v1005 = vsel %vm219, %v206, %v1004
  %v1006 = vsel %vm222, %v209, %v1005
  %v1007 = vsel %vm204, %v215, %v212
  %v1008 = vsel %vm207, %v218, %v1007
  %v1009 = vsel %vm210, %v221, %v1008
  %v1013 = vrot.slane %v1001, 4
  %1014 = vrot.lane.b32.xlu0 %v1013, 32
  %v1015 = vpop.permute.xlu0 %1014
  %v1017 = vsel %vm225, %v1006, %v1015
  %v1018 = vsel %vm225, %v1009, %v1015
  %1020 = vrot.lane.b32.xlu0 %v1002, 32
  %v1021 = vpop.permute.xlu0 %1020
  %v1023 = vsel %vm225, %v1001, %v1021
  %1025 = vrot.lane.b32.xlu0 %v1003, 32
  %v1026 = vpop.permute.xlu0 %1025
  %v1028 = vsel %vm225, %v1002, %v1026
  %v1030 = vrot.slane %v1023, 4
  %v1032 = vrot.slane %v1028, 4
  %vm1035 = vcmask 1043456
  %v1036 = vrot.slane %v1017, 4
  %v1037 = vrot.slane %v1018, 4
  %v1038 = vsel %vm1035, %v1036, %v1037
  %v1039 = vsel %vm245, %v1038, 0
  %1041 = vmatprep.subr.mxu0 0.0
  %1042 = vmatpush1.msra.mxu0 %v168
  %1043 = vmatprep.subr.mxu0 0.0
  %1044 = vmatpush1.msra.mxu0 %v169
  %1045 = vmatprep.subr.mxu0 0.0
  %1046 = vmatpush1.msra.mxu0 %v170
  %1047 = vmatprep.subr.mxu0 0.0
  %1048 = vmatpush1.msra.mxu0 %v171
  %1049 = vmatprep.subr.mxu0 0.0
  %1050 = vmatpush1.msra.mxu0 %v172
  %1051 = vmatprep.subr.mxu0 0.0
  %1052 = vmatpush1.msra.mxu0 %v173
  %1053 = vmatprep.subr.mxu0 0.0
  %1054 = vmatpush1.msra.mxu0 %v174
  %1055 = vmatprep.subr.mxu0 0.0
  %1056 = vmatpush1.msra.mxu0 %v175
  %1057 = vmatprep.subr.mxu0 0.0
  %1058 = vmatpush1.msra.mxu0 0.0
  %1059 = vmatprep.subr.mxu0 0.0
  %1060 = vmatpush1.msra.mxu0 0.0
  %1061 = vmatprep.subr.mxu0 0.0
  %1062 = vmatpush1.msra.mxu0 0.0
  %1063 = vmatprep.subr.mxu0 0.0
  %1064 = vmatpush1.msra.mxu0 0.0
  %1065 = vmatprep.subr.mxu0 0.0
  %1066 = vmatpush1.msra.mxu0 0.0
  %1067 = vmatprep.subr.mxu0 0.0
  %1068 = vmatpush1.msra.mxu0 0.0
  %1069 = vmatprep.subr.mxu0 0.0
  %1070 = vmatpush1.msra.mxu0 0.0
  %1071 = vmatprep.subr.mxu0 0.0
  %1072 = vmatpush1.msra.mxu0 0.0
  %1073 = vmatprep.subr.mxu0 0.0
  %1074 = vmatpush1.msra.mxu0 0.0
  %1075 = vmatprep.subr.mxu0 0.0
  %1076 = vmatpush1.msra.mxu0 0.0
  %1077 = vmatprep.subr.mxu0 0.0
  %1078 = vmatpush1.msra.mxu0 0.0
  %1079 = vmatprep.subr.mxu0 0.0
  %1080 = vmatpush1.msra.mxu0 0.0
  %1081 = vmatprep.subr.mxu0 0.0
  %1082 = vmatpush1.msra.mxu0 0.0
  %1083 = vmatprep.subr.mxu0 0.0
  %1084 = vmatpush1.msra.mxu0 0.0
  %1085 = vmatprep.subr.mxu0 0.0
  %1086 = vmatpush1.msra.mxu0 0.0
  %1087 = vmatprep.subr.mxu0 0.0
  %1088 = vmatpush1.msra.mxu0 0.0
  %1089 = vmatprep.subr.mxu0 0.0
  %1090 = vmatpush1.msra.mxu0 0.0
  %1091 = vmatprep.subr.mxu0 0.0
  %1092 = vmatpush1.msra.mxu0 0.0
  %1093 = vmatprep.subr.mxu0 0.0
  %1094 = vmatpush1.msra.mxu0 0.0
  %1095 = vmatprep.subr.mxu0 0.0
  %1096 = vmatpush1.msra.mxu0 0.0
  %1097 = vmatprep.subr.mxu0 0.0
  %1098 = vmatpush1.msra.mxu0 0.0
  %1099 = vmatprep.subr.mxu0 0.0
  %1100 = vmatpush1.msra.mxu0 0.0
  %1101 = vmatprep.subr.mxu0 0.0
  %1102 = vmatpush1.msra.mxu0 0.0
  %1103 = vmatprep.subr.mxu0 0.0
  %1104 = vmatpush1.msra.mxu0 0.0
  %1105 = vmatprep.mubr.f32.mxu0 0.0
  %1106 = vmatmul.mubr.f32.gmra.mrb[0].mxu0 %v1039
  %v1107 = vpop.f32.mrb[0].mxu0
  %v1108 = vadd.f32 %v233, %v1107
  %v1109 = vpop.f32.mrb[0].mxu0
  %1110 = vdwg.mxu0
  %v1111 = vrot.slane %v1030, 4
  %v1112 = vsel %vm1035, %v1111, %v1111
  %v1113 = vsel %vm245, %v1112, 0
  %1115 = vmatprep.subr.mxu0 0.0
  %1116 = vmatpush1.msra.mxu0 %v176
  %1117 = vmatprep.subr.mxu0 0.0
  %1118 = vmatpush1.msra.mxu0 %v177
  %1119 = vmatprep.subr.mxu0 0.0
  %1120 = vmatpush1.msra.mxu0 %v178
  %1121 = vmatprep.subr.mxu0 0.0
  %1122 = vmatpush1.msra.mxu0 %v179
  %1123 = vmatprep.subr.mxu0 0.0
  %1124 = vmatpush1.msra.mxu0 %v180
  %1125 = vmatprep.subr.mxu0 0.0
  %1126 = vmatpush1.msra.mxu0 %v181
  %1127 = vmatprep.subr.mxu0 0.0
  %1128 = vmatpush1.msra.mxu0 %v182
  %1129 = vmatprep.subr.mxu0 0.0
  %1130 = vmatpush1.msra.mxu0 %v183
  %1131 = vmatprep.subr.mxu0 0.0
  %1132 = vmatpush1.msra.mxu0 0.0
  %1133 = vmatprep.subr.mxu0 0.0
  %1134 = vmatpush1.msra.mxu0 0.0
  %1135 = vmatprep.subr.mxu0 0.0
  %1136 = vmatpush1.msra.mxu0 0.0
  %1137 = vmatprep.subr.mxu0 0.0
  %1138 = vmatpush1.msra.mxu0 0.0
  %1139 = vmatprep.subr.mxu0 0.0
  %1140 = vmatpush1.msra.mxu0 0.0
  %1141 = vmatprep.subr.mxu0 0.0
  %1142 = vmatpush1.msra.mxu0 0.0
  %1143 = vmatprep.subr.mxu0 0.0
  %1144 = vmatpush1.msra.mxu0 0.0
  %1145 = vmatprep.subr.mxu0 0.0
  %1146 = vmatpush1.msra.mxu0 0.0
  %1147 = vmatprep.subr.mxu0 0.0
  %1148 = vmatpush1.msra.mxu0 0.0
  %1149 = vmatprep.subr.mxu0 0.0
  %1150 = vmatpush1.msra.mxu0 0.0
  %1151 = vmatprep.subr.mxu0 0.0
  %1152 = vmatpush1.msra.mxu0 0.0
  %1153 = vmatprep.subr.mxu0 0.0
  %1154 = vmatpush1.msra.mxu0 0.0
  %1155 = vmatprep.subr.mxu0 0.0
  %1156 = vmatpush1.msra.mxu0 0.0
  %1157 = vmatprep.subr.mxu0 0.0
  %1158 = vmatpush1.msra.mxu0 0.0
  %1159 = vmatprep.subr.mxu0 0.0
  %1160 = vmatpush1.msra.mxu0 0.0
  %1161 = vmatprep.subr.mxu0 0.0
  %1162 = vmatpush1.msra.mxu0 0.0
  %1163 = vmatprep.subr.mxu0 0.0
  %1164 = vmatpush1.msra.mxu0 0.0
  %1165 = vmatprep.subr.mxu0 0.0
  %1166 = vmatpush1.msra.mxu0 0.0
  %1167 = vmatprep.subr.mxu0 0.0
  %1168 = vmatpush1.msra.mxu0 0.0
  %1169 = vmatprep.subr.mxu0 0.0
  %1170 = vmatpush1.msra.mxu0 0.0
  %1171 = vmatprep.subr.mxu0 0.0
  %1172 = vmatpush1.msra.mxu0 0.0
  %1173 = vmatprep.subr.mxu0 0.0
  %1174 = vmatpush1.msra.mxu0 0.0
  %1175 = vmatprep.subr.mxu0 0.0
  %1176 = vmatpush1.msra.mxu0 0.0
  %1177 = vmatprep.subr.mxu0 0.0
  %1178 = vmatpush1.msra.mxu0 0.0
  %1179 = vmatprep.mubr.f32.mxu0 0.0
  %1180 = vmatmul.mubr.f32.gmra.mrb[0].mxu0 %v1113
  %v1181 = vpop.f32.mrb[0].mxu0
  %v1182 = vadd.f32 %v237, %v1181
  %v1183 = vpop.f32.mrb[0].mxu0
  %1184 = vdwg.mxu0
  %v1185 = vrot.slane %v1032, 4
  %v1186 = vsel %vm1035, %v1185, %v1185
  %v1187 = vsel %vm245, %v1186, 0
  %1189 = vmatprep.subr.mxu0 0.0
  %1190 = vmatpush1.msra.mxu0 %v184
  %1191 = vmatprep.subr.mxu0 0.0
  %1192 = vmatpush1.msra.mxu0 %v185
  %1193 = vmatprep.subr.mxu0 0.0
  %1194 = vmatpush1.msra.mxu0 %v186
  %1195 = vmatprep.subr.mxu0 0.0
  %1196 = vmatpush1.msra.mxu0 %v187
  %1197 = vmatprep.subr.mxu0 0.0
  %1198 = vmatpush1.msra.mxu0 %v188
  %1199 = vmatprep.subr.mxu0 0.0
  %1200 = vmatpush1.msra.mxu0 %v189
  %1201 = vmatprep.subr.mxu0 0.0
  %1202 = vmatpush1.msra.mxu0 %v190
  %1203 = vmatprep.subr.mxu0 0.0
  %1204 = vmatpush1.msra.mxu0 %v191
  %1205 = vmatprep.subr.mxu0 0.0
  %1206 = vmatpush1.msra.mxu0 0.0
  %1207 = vmatprep.subr.mxu0 0.0
  %1208 = vmatpush1.msra.mxu0 0.0
  %1209 = vmatprep.subr.mxu0 0.0
  %1210 = vmatpush1.msra.mxu0 0.0
  %1211 = vmatprep.subr.mxu0 0.0
  %1212 = vmatpush1.msra.mxu0 0.0
  %1213 = vmatprep.subr.mxu0 0.0
  %1214 = vmatpush1.msra.mxu0 0.0
  %1215 = vmatprep.subr.mxu0 0.0
  %1216 = vmatpush1.msra.mxu0 0.0
  %1217 = vmatprep.subr.mxu0 0.0
  %1218 = vmatpush1.msra.mxu0 0.0
  %1219 = vmatprep.subr.mxu0 0.0
  %1220 = vmatpush1.msra.mxu0 0.0
  %1221 = vmatprep.subr.mxu0 0.0
  %1222 = vmatpush1.msra.mxu0 0.0
  %1223 = vmatprep.subr.mxu0 0.0
  %1224 = vmatpush1.msra.mxu0 0.0
  %1225 = vmatprep.subr.mxu0 0.0
  %1226 = vmatpush1.msra.mxu0 0.0
  %1227 = vmatprep.subr.mxu0 0.0
  %1228 = vmatpush1.msra.mxu0 0.0
  %1229 = vmatprep.subr.mxu0 0.0
  %1230 = vmatpush1.msra.mxu0 0.0
  %1231 = vmatprep.subr.mxu0 0.0
  %1232 = vmatpush1.msra.mxu0 0.0
  %1233 = vmatprep.subr.mxu0 0.0
  %1234 = vmatpush1.msra.mxu0 0.0
  %1235 = vmatprep.subr.mxu0 0.0
  %1236 = vmatpush1.msra.mxu0 0.0
  %1237 = vmatprep.subr.mxu0 0.0
  %1238 = vmatpush1.msra.mxu0 0.0
  %1239 = vmatprep.subr.mxu0 0.0
  %1240 = vmatpush1.msra.mxu0 0.0
  %1241 = vmatprep.subr.mxu0 0.0
  %1242 = vmatpush1.msra.mxu0 0.0
  %1243 = vmatprep.subr.mxu0 0.0
  %1244 = vmatpush1.msra.mxu0 0.0
  %1245 = vmatprep.subr.mxu0 0.0
  %1246 = vmatpush1.msra.mxu0 0.0
  %1247 = vmatprep.subr.mxu0 0.0
  %1248 = vmatpush1.msra.mxu0 0.0
  %1249 = vmatprep.subr.mxu0 0.0
  %1250 = vmatpush1.msra.mxu0 0.0
  %1251 = vmatprep.subr.mxu0 0.0
  %1252 = vmatpush1.msra.mxu0 0.0
  %1253 = vmatprep.mubr.f32.mxu0 0.0
  %1254 = vmatmul.mubr.f32.gmra.mrb[0].mxu0 %v1187
  %v1255 = vpop.f32.mrb[0].mxu0
  %v1256 = vadd.f32 %v241, %v1255
  %v1257 = vpop.f32.mrb[0].mxu0
  %1258 = vdwg.mxu0
  %v1259 = vtanh.pop %v1108
  %v1260 = vtanh.pop %v1182
  %v1261 = vtanh.pop %v1256
  %v1262 = vsel %vm219, %v203, %v130
  %v1263 = vsel %vm222, %v206, %v1262
  %v1264 = vsel %vm204, %v212, %v209
  %v1265 = vsel %vm207, %v215, %v1264
  %v1266 = vsel %vm210, %v218, %v1265
  %v1267 = vsel %vm213, %v221, %v1266
  %v1271 = vrot.slane %v1259, 3
  %1272 = vrot.lane.b32.xlu0 %v1271, 32
  %v1273 = vpop.permute.xlu0 %1272
  %v1275 = vsel %vm225, %v1263, %v1273
  %v1276 = vsel %vm225, %v1267, %v1273
  %1278 = vrot.lane.b32.xlu0 %v1260, 32
  %v1279 = vpop.permute.xlu0 %1278
  %v1281 = vsel %vm225, %v1259, %v1279
  %1283 = vrot.lane.b32.xlu0 %v1261, 32
  %v1284 = vpop.permute.xlu0 %1283
  %v1286 = vsel %vm225, %v1260, %v1284
  %v1288 = vrot.slane %v1281, 3
  %v1290 = vrot.slane %v1286, 3
  %vm1293 = vcmask 1042432
  %v1294 = vrot.slane %v1275, 5
  %v1295 = vrot.slane %v1276, 5
  %v1296 = vsel %vm1293, %v1294, %v1295
  %v1297 = vsel %vm245, %v1296, 0
  %1299 = vmatprep.subr.mxu0 0.0
  %1300 = vmatpush1.msra.mxu0 %v168
  %1301 = vmatprep.subr.mxu0 0.0
  %1302 = vmatpush1.msra.mxu0 %v169
  %1303 = vmatprep.subr.mxu0 0.0
  %1304 = vmatpush1.msra.mxu0 %v170
  %1305 = vmatprep.subr.mxu0 0.0
  %1306 = vmatpush1.msra.mxu0 %v171
  %1307 = vmatprep.subr.mxu0 0.0
  %1308 = vmatpush1.msra.mxu0 %v172
  %1309 = vmatprep.subr.mxu0 0.0
  %1310 = vmatpush1.msra.mxu0 %v173
  %1311 = vmatprep.subr.mxu0 0.0
  %1312 = vmatpush1.msra.mxu0 %v174
  %1313 = vmatprep.subr.mxu0 0.0
  %1314 = vmatpush1.msra.mxu0 %v175
  %1315 = vmatprep.subr.mxu0 0.0
  %1316 = vmatpush1.msra.mxu0 0.0
  %1317 = vmatprep.subr.mxu0 0.0
  %1318 = vmatpush1.msra.mxu0 0.0
  %1319 = vmatprep.subr.mxu0 0.0
  %1320 = vmatpush1.msra.mxu0 0.0
  %1321 = vmatprep.subr.mxu0 0.0
  %1322 = vmatpush1.msra.mxu0 0.0
  %1323 = vmatprep.subr.mxu0 0.0
  %1324 = vmatpush1.msra.mxu0 0.0
  %1325 = vmatprep.subr.mxu0 0.0
  %1326 = vmatpush1.msra.mxu0 0.0
  %1327 = vmatprep.subr.mxu0 0.0
  %1328 = vmatpush1.msra.mxu0 0.0
  %1329 = vmatprep.subr.mxu0 0.0
  %1330 = vmatpush1.msra.mxu0 0.0
  %1331 = vmatprep.subr.mxu0 0.0
  %1332 = vmatpush1.msra.mxu0 0.0
  %1333 = vmatprep.subr.mxu0 0.0
  %1334 = vmatpush1.msra.mxu0 0.0
  %1335 = vmatprep.subr.mxu0 0.0
  %1336 = vmatpush1.msra.mxu0 0.0
  %1337 = vmatprep.subr.mxu0 0.0
  %1338 = vmatpush1.msra.mxu0 0.0
  %1339 = vmatprep.subr.mxu0 0.0
  %1340 = vmatpush1.msra.mxu0 0.0
  %1341 = vmatprep.subr.mxu0 0.0
  %1342 = vmatpush1.msra.mxu0 0.0
  %1343 = vmatprep.subr.mxu0 0.0
  %1344 = vmatpush1.msra.mxu0 0.0
  %1345 = vmatprep.subr.mxu0 0.0
  %1346 = vmatpush1.msra.mxu0 0.0
  %1347 = vmatprep.subr.mxu0 0.0
  %1348 = vmatpush1.msra.mxu0 0.0
  %1349 = vmatprep.subr.mxu0 0.0
  %1350 = vmatpush1.msra.mxu0 0.0
  %1351 = vmatprep.subr.mxu0 0.0
  %1352 = vmatpush1.msra.mxu0 0.0
  %1353 = vmatprep.subr.mxu0 0.0
  %1354 = vmatpush1.msra.mxu0 0.0
  %1355 = vmatprep.subr.mxu0 0.0
  %1356 = vmatpush1.msra.mxu0 0.0
  %1357 = vmatprep.subr.mxu0 0.0
  %1358 = vmatpush1.msra.mxu0 0.0
  %1359 = vmatprep.subr.mxu0 0.0
  %1360 = vmatpush1.msra.mxu0 0.0
  %1361 = vmatprep.subr.mxu0 0.0
  %1362 = vmatpush1.msra.mxu0 0.0
  %1363 = vmatprep.mubr.f32.mxu0 0.0
  %1364 = vmatmul.mubr.f32.gmra.mrb[0].mxu0 %v1297
  %v1365 = vpop.f32.mrb[0].mxu0
  %v1366 = vadd.f32 %v233, %v1365
  %v1367 = vpop.f32.mrb[0].mxu0
  %1368 = vdwg.mxu0
  %v1369 = vrot.slane %v1288, 5
  %v1370 = vsel %vm1293, %v1369, %v1369
  %v1371 = vsel %vm245, %v1370, 0
  %1373 = vmatprep.subr.mxu0 0.0
  %1374 = vmatpush1.msra.mxu0 %v176
  %1375 = vmatprep.subr.mxu0 0.0
  %1376 = vmatpush1.msra.mxu0 %v177
  %1377 = vmatprep.subr.mxu0 0.0
  %1378 = vmatpush1.msra.mxu0 %v178
  %1379 = vmatprep.subr.mxu0 0.0
  %1380 = vmatpush1.msra.mxu0 %v179
  %1381 = vmatprep.subr.mxu0 0.0
  %1382 = vmatpush1.msra.mxu0 %v180
  %1383 = vmatprep.subr.mxu0 0.0
  %1384 = vmatpush1.msra.mxu0 %v181
  %1385 = vmatprep.subr.mxu0 0.0
  %1386 = vmatpush1.msra.mxu0 %v182
  %1387 = vmatprep.subr.mxu0 0.0
  %1388 = vmatpush1.msra.mxu0 %v183
  %1389 = vmatprep.subr.mxu0 0.0
  %1390 = vmatpush1.msra.mxu0 0.0
  %1391 = vmatprep.subr.mxu0 0.0
  %1392 = vmatpush1.msra.mxu0 0.0
  %1393 = vmatprep.subr.mxu0 0.0
  %1394 = vmatpush1.msra.mxu0 0.0
  %1395 = vmatprep.subr.mxu0 0.0
  %1396 = vmatpush1.msra.mxu0 0.0
  %1397 = vmatprep.subr.mxu0 0.0
  %1398 = vmatpush1.msra.mxu0 0.0
  %1399 = vmatprep.subr.mxu0 0.0
  %1400 = vmatpush1.msra.mxu0 0.0
  %1401 = vmatprep.subr.mxu0 0.0
  %1402 = vmatpush1.msra.mxu0 0.0
  %1403 = vmatprep.subr.mxu0 0.0
  %1404 = vmatpush1.msra.mxu0 0.0
  %1405 = vmatprep.subr.mxu0 0.0
  %1406 = vmatpush1.msra.mxu0 0.0
  %1407 = vmatprep.subr.mxu0 0.0
  %1408 = vmatpush1.msra.mxu0 0.0
  %1409 = vmatprep.subr.mxu0 0.0
  %1410 = vmatpush1.msra.mxu0 0.0
  %1411 = vmatprep.subr.mxu0 0.0
  %1412 = vmatpush1.msra.mxu0 0.0
  %1413 = vmatprep.subr.mxu0 0.0
  %1414 = vmatpush1.msra.mxu0 0.0
  %1415 = vmatprep.subr.mxu0 0.0
  %1416 = vmatpush1.msra.mxu0 0.0
  %1417 = vmatprep.subr.mxu0 0.0
  %1418 = vmatpush1.msra.mxu0 0.0
  %1419 = vmatprep.subr.mxu0 0.0
  %1420 = vmatpush1.msra.mxu0 0.0
  %1421 = vmatprep.subr.mxu0 0.0
  %1422 = vmatpush1.msra.mxu0 0.0
  %1423 = vmatprep.subr.mxu0 0.0
  %1424 = vmatpush1.msra.mxu0 0.0
  %1425 = vmatprep.subr.mxu0 0.0
  %1426 = vmatpush1.msra.mxu0 0.0
  %1427 = vmatprep.subr.mxu0 0.0
  %1428 = vmatpush1.msra.mxu0 0.0
  %1429 = vmatprep.subr.mxu0 0.0
  %1430 = vmatpush1.msra.mxu0 0.0
  %1431 = vmatprep.subr.mxu0 0.0
  %1432 = vmatpush1.msra.mxu0 0.0
  %1433 = vmatprep.subr.mxu0 0.0
  %1434 = vmatpush1.msra.mxu0 0.0
  %1435 = vmatprep.subr.mxu0 0.0
  %1436 = vmatpush1.msra.mxu0 0.0
  %1437 = vmatprep.mubr.f32.mxu0 0.0
  %1438 = vmatmul.mubr.f32.gmra.mrb[0].mxu0 %v1371
  %v1439 = vpop.f32.mrb[0].mxu0
  %v1440 = vadd.f32 %v237, %v1439
  %v1441 = vpop.f32.mrb[0].mxu0
  %1442 = vdwg.mxu0
  %v1443 = vrot.slane %v1290, 5
  %v1444 = vsel %vm1293, %v1443, %v1443
  %v1445 = vsel %vm245, %v1444, 0
  %1447 = vmatprep.subr.mxu0 0.0
  %1448 = vmatpush1.msra.mxu0 %v184
  %1449 = vmatprep.subr.mxu0 0.0
  %1450 = vmatpush1.msra.mxu0 %v185
  %1451 = vmatprep.subr.mxu0 0.0
  %1452 = vmatpush1.msra.mxu0 %v186
  %1453 = vmatprep.subr.mxu0 0.0
  %1454 = vmatpush1.msra.mxu0 %v187
  %1455 = vmatprep.subr.mxu0 0.0
  %1456 = vmatpush1.msra.mxu0 %v188
  %1457 = vmatprep.subr.mxu0 0.0
  %1458 = vmatpush1.msra.mxu0 %v189
  %1459 = vmatprep.subr.mxu0 0.0
  %1460 = vmatpush1.msra.mxu0 %v190
  %1461 = vmatprep.subr.mxu0 0.0
  %1462 = vmatpush1.msra.mxu0 %v191
  %1463 = vmatprep.subr.mxu0 0.0
  %1464 = vmatpush1.msra.mxu0 0.0
  %1465 = vmatprep.subr.mxu0 0.0
  %1466 = vmatpush1.msra.mxu0 0.0
  %1467 = vmatprep.subr.mxu0 0.0
  %1468 = vmatpush1.msra.mxu0 0.0
  %1469 = vmatprep.subr.mxu0 0.0
  %1470 = vmatpush1.msra.mxu0 0.0
  %1471 = vmatprep.subr.mxu0 0.0
  %1472 = vmatpush1.msra.mxu0 0.0
  %1473 = vmatprep.subr.mxu0 0.0
  %1474 = vmatpush1.msra.mxu0 0.0
  %1475 = vmatprep.subr.mxu0 0.0
  %1476 = vmatpush1.msra.mxu0 0.0
  %1477 = vmatprep.subr.mxu0 0.0
  %1478 = vmatpush1.msra.mxu0 0.0
  %1479 = vmatprep.subr.mxu0 0.0
  %1480 = vmatpush1.msra.mxu0 0.0
  %1481 = vmatprep.subr.mxu0 0.0
  %1482 = vmatpush1.msra.mxu0 0.0
  %1483 = vmatprep.subr.mxu0 0.0
  %1484 = vmatpush1.msra.mxu0 0.0
  %1485 = vmatprep.subr.mxu0 0.0
  %1486 = vmatpush1.msra.mxu0 0.0
  %1487 = vmatprep.subr.mxu0 0.0
  %1488 = vmatpush1.msra.mxu0 0.0
  %1489 = vmatprep.subr.mxu0 0.0
  %1490 = vmatpush1.msra.mxu0 0.0
  %1491 = vmatprep.subr.mxu0 0.0
  %1492 = vmatpush1.msra.mxu0 0.0
  %1493 = vmatprep.subr.mxu0 0.0
  %1494 = vmatpush1.msra.mxu0 0.0
  %1495 = vmatprep.subr.mxu0 0.0
  %1496 = vmatpush1.msra.mxu0 0.0
  %1497 = vmatprep.subr.mxu0 0.0
  %1498 = vmatpush1.msra.mxu0 0.0
  %1499 = vmatprep.subr.mxu0 0.0
  %1500 = vmatpush1.msra.mxu0 0.0
  %1501 = vmatprep.subr.mxu0 0.0
  %1502 = vmatpush1.msra.mxu0 0.0
  %1503 = vmatprep.subr.mxu0 0.0
  %1504 = vmatpush1.msra.mxu0 0.0
  %1505 = vmatprep.subr.mxu0 0.0
  %1506 = vmatpush1.msra.mxu0 0.0
  %1507 = vmatprep.subr.mxu0 0.0
  %1508 = vmatpush1.msra.mxu0 0.0
  %1509 = vmatprep.subr.mxu0 0.0
  %1510 = vmatpush1.msra.mxu0 0.0
  %1511 = vmatprep.mubr.f32.mxu0 0.0
  %1512 = vmatmul.mubr.f32.gmra.mrb[0].mxu0 %v1445
  %v1513 = vpop.f32.mrb[0].mxu0
  %v1514 = vadd.f32 %v241, %v1513
  %v1515 = vpop.f32.mrb[0].mxu0
  %1516 = vdwg.mxu0
  %v1517 = vtanh.pop %v1366
  %v1518 = vtanh.pop %v1440
  %v1519 = vtanh.pop %v1514
  %v1520 = vsel %vm222, %v203, %v130
  %v1521 = vsel %vm204, %v209, %v206
  %v1522 = vsel %vm207, %v212, %v1521
  %v1523 = vsel %vm210, %v215, %v1522
  %v1524 = vsel %vm213, %v218, %v1523
  %v1525 = vsel %vm216, %v221, %v1524
  %v1529 = vrot.slane %v1517, 2
  %1530 = vrot.lane.b32.xlu0 %v1529, 32
  %v1531 = vpop.permute.xlu0 %1530
  %v1533 = vsel %vm225, %v1520, %v1531
  %v1534 = vsel %vm225, %v1525, %v1531
  %1536 = vrot.lane.b32.xlu0 %v1518, 32
  %v1537 = vpop.permute.xlu0 %1536
  %v1539 = vsel %vm225, %v1517, %v1537
  %1541 = vrot.lane.b32.xlu0 %v1519, 32
  %v1542 = vpop.permute.xlu0 %1541
  %v1544 = vsel %vm225, %v1518, %v1542
  %v1546 = vrot.slane %v1539, 2
  %v1548 = vrot.slane %v1544, 2
  %vm1551 = vcmask 1041408
  %v1552 = vrot.slane %v1533, 6
  %v1553 = vrot.slane %v1534, 6
  %v1554 = vsel %vm1551, %v1552, %v1553
  %v1555 = vsel %vm245, %v1554, 0
  %1557 = vmatprep.subr.mxu0 0.0
  %1558 = vmatpush1.msra.mxu0 %v168
  %1559 = vmatprep.subr.mxu0 0.0
  %1560 = vmatpush1.msra.mxu0 %v169
  %1561 = vmatprep.subr.mxu0 0.0
  %1562 = vmatpush1.msra.mxu0 %v170
  %1563 = vmatprep.subr.mxu0 0.0
  %1564 = vmatpush1.msra.mxu0 %v171
  %1565 = vmatprep.subr.mxu0 0.0
  %1566 = vmatpush1.msra.mxu0 %v172
  %1567 = vmatprep.subr.mxu0 0.0
  %1568 = vmatpush1.msra.mxu0 %v173
  %1569 = vmatprep.subr.mxu0 0.0
  %1570 = vmatpush1.msra.mxu0 %v174
  %1571 = vmatprep.subr.mxu0 0.0
  %1572 = vmatpush1.msra.mxu0 %v175
  %1573 = vmatprep.subr.mxu0 0.0
  %1574 = vmatpush1.msra.mxu0 0.0
  %1575 = vmatprep.subr.mxu0 0.0
  %1576 = vmatpush1.msra.mxu0 0.0
  %1577 = vmatprep.subr.mxu0 0.0
  %1578 = vmatpush1.msra.mxu0 0.0
  %1579 = vmatprep.subr.mxu0 0.0
  %1580 = vmatpush1.msra.mxu0 0.0
  %1581 = vmatprep.subr.mxu0 0.0
  %1582 = vmatpush1.msra.mxu0 0.0
  %1583 = vmatprep.subr.mxu0 0.0
  %1584 = vmatpush1.msra.mxu0 0.0
  %1585 = vmatprep.subr.mxu0 0.0
  %1586 = vmatpush1.msra.mxu0 0.0
  %1587 = vmatprep.subr.mxu0 0.0
  %1588 = vmatpush1.msra.mxu0 0.0
  %1589 = vmatprep.subr.mxu0 0.0
  %1590 = vmatpush1.msra.mxu0 0.0
  %1591 = vmatprep.subr.mxu0 0.0
  %1592 = vmatpush1.msra.mxu0 0.0
  %1593 = vmatprep.subr.mxu0 0.0
  %1594 = vmatpush1.msra.mxu0 0.0
  %1595 = vmatprep.subr.mxu0 0.0
  %1596 = vmatpush1.msra.mxu0 0.0
  %1597 = vmatprep.subr.mxu0 0.0
  %1598 = vmatpush1.msra.mxu0 0.0
  %1599 = vmatprep.subr.mxu0 0.0
  %1600 = vmatpush1.msra.mxu0 0.0
  %1601 = vmatprep.subr.mxu0 0.0
  %1602 = vmatpush1.msra.mxu0 0.0
  %1603 = vmatprep.subr.mxu0 0.0
  %1604 = vmatpush1.msra.mxu0 0.0
  %1605 = vmatprep.subr.mxu0 0.0
  %1606 = vmatpush1.msra.mxu0 0.0
  %1607 = vmatprep.subr.mxu0 0.0
  %1608 = vmatpush1.msra.mxu0 0.0
  %1609 = vmatprep.subr.mxu0 0.0
  %1610 = vmatpush1.msra.mxu0 0.0
  %1611 = vmatprep.subr.mxu0 0.0
  %1612 = vmatpush1.msra.mxu0 0.0
  %1613 = vmatprep.subr.mxu0 0.0
  %1614 = vmatpush1.msra.mxu0 0.0
  %1615 = vmatprep.subr.mxu0 0.0
  %1616 = vmatpush1.msra.mxu0 0.0
  %1617 = vmatprep.subr.mxu0 0.0
  %1618 = vmatpush1.msra.mxu0 0.0
  %1619 = vmatprep.subr.mxu0 0.0
  %1620 = vmatpush1.msra.mxu0 0.0
  %1621 = vmatprep.mubr.f32.mxu0 0.0
  %1622 = vmatmul.mubr.f32.gmra.mrb[0].mxu0 %v1555
  %v1623 = vpop.f32.mrb[0].mxu0
  %v1624 = vadd.f32 %v233, %v1623
  %v1625 = vpop.f32.mrb[0].mxu0
  %1626 = vdwg.mxu0
  %v1627 = vrot.slane %v1546, 6
  %v1628 = vsel %vm1551, %v1627, %v1627
  %v1629 = vsel %vm245, %v1628, 0
  %1631 = vmatprep.subr.mxu0 0.0
  %1632 = vmatpush1.msra.mxu0 %v176
  %1633 = vmatprep.subr.mxu0 0.0
  %1634 = vmatpush1.msra.mxu0 %v177
  %1635 = vmatprep.subr.mxu0 0.0
  %1636 = vmatpush1.msra.mxu0 %v178
  %1637 = vmatprep.subr.mxu0 0.0
  %1638 = vmatpush1.msra.mxu0 %v179
  %1639 = vmatprep.subr.mxu0 0.0
  %1640 = vmatpush1.msra.mxu0 %v180
  %1641 = vmatprep.subr.mxu0 0.0
  %1642 = vmatpush1.msra.mxu0 %v181
  %1643 = vmatprep.subr.mxu0 0.0
  %1644 = vmatpush1.msra.mxu0 %v182
  %1645 = vmatprep.subr.mxu0 0.0
  %1646 = vmatpush1.msra.mxu0 %v183
  %1647 = vmatprep.subr.mxu0 0.0
  %1648 = vmatpush1.msra.mxu0 0.0
  %1649 = vmatprep.subr.mxu0 0.0
  %1650 = vmatpush1.msra.mxu0 0.0
  %1651 = vmatprep.subr.mxu0 0.0
  %1652 = vmatpush1.msra.mxu0 0.0
  %1653 = vmatprep.subr.mxu0 0.0
  %1654 = vmatpush1.msra.mxu0 0.0
  %1655 = vmatprep.subr.mxu0 0.0
  %1656 = vmatpush1.msra.mxu0 0.0
  %1657 = vmatprep.subr.mxu0 0.0
  %1658 = vmatpush1.msra.mxu0 0.0
  %1659 = vmatprep.subr.mxu0 0.0
  %1660 = vmatpush1.msra.mxu0 0.0
  %1661 = vmatprep.subr.mxu0 0.0
  %1662 = vmatpush1.msra.mxu0 0.0
  %1663 = vmatprep.subr.mxu0 0.0
  %1664 = vmatpush1.msra.mxu0 0.0
  %1665 = vmatprep.subr.mxu0 0.0
  %1666 = vmatpush1.msra.mxu0 0.0
  %1667 = vmatprep.subr.mxu0 0.0
  %1668 = vmatpush1.msra.mxu0 0.0
  %1669 = vmatprep.subr.mxu0 0.0
  %1670 = vmatpush1.msra.mxu0 0.0
  %1671 = vmatprep.subr.mxu0 0.0
  %1672 = vmatpush1.msra.mxu0 0.0
  %1673 = vmatprep.subr.mxu0 0.0
  %1674 = vmatpush1.msra.mxu0 0.0
  %1675 = vmatprep.subr.mxu0 0.0
  %1676 = vmatpush1.msra.mxu0 0.0
  %1677 = vmatprep.subr.mxu0 0.0
  %1678 = vmatpush1.msra.mxu0 0.0
  %1679 = vmatprep.subr.mxu0 0.0
  %1680 = vmatpush1.msra.mxu0 0.0
  %1681 = vmatprep.subr.mxu0 0.0
  %1682 = vmatpush1.msra.mxu0 0.0
  %1683 = vmatprep.subr.mxu0 0.0
  %1684 = vmatpush1.msra.mxu0 0.0
  %1685 = vmatprep.subr.mxu0 0.0
  %1686 = vmatpush1.msra.mxu0 0.0
  %1687 = vmatprep.subr.mxu0 0.0
  %1688 = vmatpush1.msra.mxu0 0.0
  %1689 = vmatprep.subr.mxu0 0.0
  %1690 = vmatpush1.msra.mxu0 0.0
  %1691 = vmatprep.subr.mxu0 0.0
  %1692 = vmatpush1.msra.mxu0 0.0
  %1693 = vmatprep.subr.mxu0 0.0
  %1694 = vmatpush1.msra.mxu0 0.0
  %1695 = vmatprep.mubr.f32.mxu0 0.0
  %1696 = vmatmul.mubr.f32.gmra.mrb[0].mxu0 %v1629
  %v1697 = vpop.f32.mrb[0].mxu0
  %v1698 = vadd.f32 %v237, %v1697
  %v1699 = vpop.f32.mrb[0].mxu0
  %1700 = vdwg.mxu0
  %v1701 = vrot.slane %v1548, 6
  %v1702 = vsel %vm1551, %v1701, %v1701
  %v1703 = vsel %vm245, %v1702, 0
  %1705 = vmatprep.subr.mxu0 0.0
  %1706 = vmatpush1.msra.mxu0 %v184
  %1707 = vmatprep.subr.mxu0 0.0
  %1708 = vmatpush1.msra.mxu0 %v185
  %1709 = vmatprep.subr.mxu0 0.0
  %1710 = vmatpush1.msra.mxu0 %v186
  %1711 = vmatprep.subr.mxu0 0.0
  %1712 = vmatpush1.msra.mxu0 %v187
  %1713 = vmatprep.subr.mxu0 0.0
  %1714 = vmatpush1.msra.mxu0 %v188
  %1715 = vmatprep.subr.mxu0 0.0
  %1716 = vmatpush1.msra.mxu0 %v189
  %1717 = vmatprep.subr.mxu0 0.0
  %1718 = vmatpush1.msra.mxu0 %v190
  %1719 = vmatprep.subr.mxu0 0.0
  %1720 = vmatpush1.msra.mxu0 %v191
  %1721 = vmatprep.subr.mxu0 0.0
  %1722 = vmatpush1.msra.mxu0 0.0
  %1723 = vmatprep.subr.mxu0 0.0
  %1724 = vmatpush1.msra.mxu0 0.0
  %1725 = vmatprep.subr.mxu0 0.0
  %1726 = vmatpush1.msra.mxu0 0.0
  %1727 = vmatprep.subr.mxu0 0.0
  %1728 = vmatpush1.msra.mxu0 0.0
  %1729 = vmatprep.subr.mxu0 0.0
  %1730 = vmatpush1.msra.mxu0 0.0
  %1731 = vmatprep.subr.mxu0 0.0
  %1732 = vmatpush1.msra.mxu0 0.0
  %1733 = vmatprep.subr.mxu0 0.0
  %1734 = vmatpush1.msra.mxu0 0.0
  %1735 = vmatprep.subr.mxu0 0.0
  %1736 = vmatpush1.msra.mxu0 0.0
  %1737 = vmatprep.subr.mxu0 0.0
  %1738 = vmatpush1.msra.mxu0 0.0
  %1739 = vmatprep.subr.mxu0 0.0
  %1740 = vmatpush1.msra.mxu0 0.0
  %1741 = vmatprep.subr.mxu0 0.0
  %1742 = vmatpush1.msra.mxu0 0.0
  %1743 = vmatprep.subr.mxu0 0.0
  %1744 = vmatpush1.msra.mxu0 0.0
  %1745 = vmatprep.subr.mxu0 0.0
  %1746 = vmatpush1.msra.mxu0 0.0
  %1747 = vmatprep.subr.mxu0 0.0
  %1748 = vmatpush1.msra.mxu0 0.0
  %1749 = vmatprep.subr.mxu0 0.0
  %1750 = vmatpush1.msra.mxu0 0.0
  %1751 = vmatprep.subr.mxu0 0.0
  %1752 = vmatpush1.msra.mxu0 0.0
  %1753 = vmatprep.subr.mxu0 0.0
  %1754 = vmatpush1.msra.mxu0 0.0
  %1755 = vmatprep.subr.mxu0 0.0
  %1756 = vmatpush1.msra.mxu0 0.0
  %1757 = vmatprep.subr.mxu0 0.0
  %1758 = vmatpush1.msra.mxu0 0.0
  %1759 = vmatprep.subr.mxu0 0.0
  %1760 = vmatpush1.msra.mxu0 0.0
  %1761 = vmatprep.subr.mxu0 0.0
  %1762 = vmatpush1.msra.mxu0 0.0
  %1763 = vmatprep.subr.mxu0 0.0
  %1764 = vmatpush1.msra.mxu0 0.0
  %1765 = vmatprep.subr.mxu0 0.0
  %1766 = vmatpush1.msra.mxu0 0.0
  %1767 = vmatprep.subr.mxu0 0.0
  %1768 = vmatpush1.msra.mxu0 0.0
  %1769 = vmatprep.mubr.f32.mxu0 0.0
  %1770 = vmatmul.mubr.f32.gmra.mrb[0].mxu0 %v1703
  %v1771 = vpop.f32.mrb[0].mxu0
  %v1772 = vadd.f32 %v241, %v1771
  %v1773 = vpop.f32.mrb[0].mxu0
  %1774 = vdwg.mxu0
  %v1775 = vtanh.pop %v1624
  %v1776 = vtanh.pop %v1698
  %v1777 = vtanh.pop %v1772
  %v1778 = vsel %vm204, %v206, %v203
  %v1779 = vsel %vm207, %v209, %v1778
  %v1780 = vsel %vm210, %v212, %v1779
  %v1781 = vsel %vm213, %v215, %v1780
  %v1782 = vsel %vm216, %v218, %v1781
  %v1783 = vsel %vm219, %v221, %v1782
  %v1787 = vrot.slane %v1775, 1
  %1788 = vrot.lane.b32.xlu0 %v1787, 32
  %v1789 = vpop.permute.xlu0 %1788
  %v1791 = vsel %vm225, %v130, %v1789
  %v1792 = vsel %vm225, %v1783, %v1789
  %1794 = vrot.lane.b32.xlu0 %v1776, 32
  %v1795 = vpop.permute.xlu0 %1794
  %v1797 = vsel %vm225, %v1775, %v1795
  %1799 = vrot.lane.b32.xlu0 %v1777, 32
  %v1800 = vpop.permute.xlu0 %1799
  %v1802 = vsel %vm225, %v1776, %v1800
  %v1804 = vrot.slane %v1797, 1
  %v1806 = vrot.slane %v1802, 1
  %v1809 = vrot.slane %v1791, 7
  %v1810 = vrot.slane %v1792, 7
  %v1811 = vsel %vm59, %v1809, %v1810
  %v1812 = vsel %vm245, %v1811, 0
  %1814 = vmatprep.subr.mxu0 0.0
  %1815 = vmatpush1.msra.mxu0 %v168
  %1816 = vmatprep.subr.mxu0 0.0
  %1817 = vmatpush1.msra.mxu0 %v169
  %1818 = vmatprep.subr.mxu0 0.0
  %1819 = vmatpush1.msra.mxu0 %v170
  %1820 = vmatprep.subr.mxu0 0.0
  %1821 = vmatpush1.msra.mxu0 %v171
  %1822 = vmatprep.subr.mxu0 0.0
  %1823 = vmatpush1.msra.mxu0 %v172
  %1824 = vmatprep.subr.mxu0 0.0
  %1825 = vmatpush1.msra.mxu0 %v173
  %1826 = vmatprep.subr.mxu0 0.0
  %1827 = vmatpush1.msra.mxu0 %v174
  %1828 = vmatprep.subr.mxu0 0.0
  %1829 = vmatpush1.msra.mxu0 %v175
  %1830 = vmatprep.subr.mxu0 0.0
  %1831 = vmatpush1.msra.mxu0 0.0
  %1832 = vmatprep.subr.mxu0 0.0
  %1833 = vmatpush1.msra.mxu0 0.0
  %1834 = vmatprep.subr.mxu0 0.0
  %1835 = vmatpush1.msra.mxu0 0.0
  %1836 = vmatprep.subr.mxu0 0.0
  %1837 = vmatpush1.msra.mxu0 0.0
  %1838 = vmatprep.subr.mxu0 0.0
  %1839 = vmatpush1.msra.mxu0 0.0
  %1840 = vmatprep.subr.mxu0 0.0
  %1841 = vmatpush1.msra.mxu0 0.0
  %1842 = vmatprep.subr.mxu0 0.0
  %1843 = vmatpush1.msra.mxu0 0.0
  %1844 = vmatprep.subr.mxu0 0.0
  %1845 = vmatpush1.msra.mxu0 0.0
  %1846 = vmatprep.subr.mxu0 0.0
  %1847 = vmatpush1.msra.mxu0 0.0
  %1848 = vmatprep.subr.mxu0 0.0
  %1849 = vmatpush1.msra.mxu0 0.0
  %1850 = vmatprep.subr.mxu0 0.0
  %1851 = vmatpush1.msra.mxu0 0.0
  %1852 = vmatprep.subr.mxu0 0.0
  %1853 = vmatpush1.msra.mxu0 0.0
  %1854 = vmatprep.subr.mxu0 0.0
  %1855 = vmatpush1.msra.mxu0 0.0
  %1856 = vmatprep.subr.mxu0 0.0
  %1857 = vmatpush1.msra.mxu0 0.0
  %1858 = vmatprep.subr.mxu0 0.0
  %1859 = vmatpush1.msra.mxu0 0.0
  %1860 = vmatprep.subr.mxu0 0.0
  %1861 = vmatpush1.msra.mxu0 0.0
  %1862 = vmatprep.subr.mxu0 0.0
  %1863 = vmatpush1.msra.mxu0 0.0
  %1864 = vmatprep.subr.mxu0 0.0
  %1865 = vmatpush1.msra.mxu0 0.0
  %1866 = vmatprep.subr.mxu0 0.0
  %1867 = vmatpush1.msra.mxu0 0.0
  %1868 = vmatprep.subr.mxu0 0.0
  %1869 = vmatpush1.msra.mxu0 0.0
  %1870 = vmatprep.subr.mxu0 0.0
  %1871 = vmatpush1.msra.mxu0 0.0
  %1872 = vmatprep.subr.mxu0 0.0
  %1873 = vmatpush1.msra.mxu0 0.0
  %1874 = vmatprep.subr.mxu0 0.0
  %1875 = vmatpush1.msra.mxu0 0.0
  %1876 = vmatprep.subr.mxu0 0.0
  %1877 = vmatpush1.msra.mxu0 0.0
  %1878 = vmatprep.mubr.f32.mxu0 0.0
  %1879 = vmatmul.mubr.f32.gmra.mrb[0].mxu0 %v1812
  %v1880 = vpop.f32.mrb[0].mxu0
  %v1881 = vadd.f32 %v233, %v1880
  %v1882 = vpop.f32.mrb[0].mxu0
  %1883 = vdwg.mxu0
  %v1884 = vrot.slane %v1804, 7
  %v1885 = vsel %vm59, %v1884, %v1884
  %v1886 = vsel %vm245, %v1885, 0
  %1888 = vmatprep.subr.mxu0 0.0
  %1889 = vmatpush1.msra.mxu0 %v176
  %1890 = vmatprep.subr.mxu0 0.0
  %1891 = vmatpush1.msra.mxu0 %v177
  %1892 = vmatprep.subr.mxu0 0.0
  %1893 = vmatpush1.msra.mxu0 %v178
  %1894 = vmatprep.subr.mxu0 0.0
  %1895 = vmatpush1.msra.mxu0 %v179
  %1896 = vmatprep.subr.mxu0 0.0
  %1897 = vmatpush1.msra.mxu0 %v180
  %1898 = vmatprep.subr.mxu0 0.0
  %1899 = vmatpush1.msra.mxu0 %v181
  %1900 = vmatprep.subr.mxu0 0.0
  %1901 = vmatpush1.msra.mxu0 %v182
  %1902 = vmatprep.subr.mxu0 0.0
  %1903 = vmatpush1.msra.mxu0 %v183
  %1904 = vmatprep.subr.mxu0 0.0
  %1905 = vmatpush1.msra.mxu0 0.0
  %1906 = vmatprep.subr.mxu0 0.0
  %1907 = vmatpush1.msra.mxu0 0.0
  %1908 = vmatprep.subr.mxu0 0.0
  %1909 = vmatpush1.msra.mxu0 0.0
  %1910 = vmatprep.subr.mxu0 0.0
  %1911 = vmatpush1.msra.mxu0 0.0
  %1912 = vmatprep.subr.mxu0 0.0
  %1913 = vmatpush1.msra.mxu0 0.0
  %1914 = vmatprep.subr.mxu0 0.0
  %1915 = vmatpush1.msra.mxu0 0.0
  %1916 = vmatprep.subr.mxu0 0.0
  %1917 = vmatpush1.msra.mxu0 0.0
  %1918 = vmatprep.subr.mxu0 0.0
  %1919 = vmatpush1.msra.mxu0 0.0
  %1920 = vmatprep.subr.mxu0 0.0
  %1921 = vmatpush1.msra.mxu0 0.0
  %1922 = vmatprep.subr.mxu0 0.0
  %1923 = vmatpush1.msra.mxu0 0.0
  %1924 = vmatprep.subr.mxu0 0.0
  %1925 = vmatpush1.msra.mxu0 0.0
  %1926 = vmatprep.subr.mxu0 0.0
  %1927 = vmatpush1.msra.mxu0 0.0
  %1928 = vmatprep.subr.mxu0 0.0
  %1929 = vmatpush1.msra.mxu0 0.0
  %1930 = vmatprep.subr.mxu0 0.0
  %1931 = vmatpush1.msra.mxu0 0.0
  %1932 = vmatprep.subr.mxu0 0.0
  %1933 = vmatpush1.msra.mxu0 0.0
  %1934 = vmatprep.subr.mxu0 0.0
  %1935 = vmatpush1.msra.mxu0 0.0
  %1936 = vmatprep.subr.mxu0 0.0
  %1937 = vmatpush1.msra.mxu0 0.0
  %1938 = vmatprep.subr.mxu0 0.0
  %1939 = vmatpush1.msra.mxu0 0.0
  %1940 = vmatprep.subr.mxu0 0.0
  %1941 = vmatpush1.msra.mxu0 0.0
  %1942 = vmatprep.subr.mxu0 0.0
  %1943 = vmatpush1.msra.mxu0 0.0
  %1944 = vmatprep.subr.mxu0 0.0
  %1945 = vmatpush1.msra.mxu0 0.0
  %1946 = vmatprep.subr.mxu0 0.0
  %1947 = vmatpush1.msra.mxu0 0.0
  %1948 = vmatprep.subr.mxu0 0.0
  %1949 = vmatpush1.msra.mxu0 0.0
  %1950 = vmatprep.subr.mxu0 0.0
  %1951 = vmatpush1.msra.mxu0 0.0
  %1952 = vmatprep.mubr.f32.mxu0 0.0
  %1953 = vmatmul.mubr.f32.gmra.mrb[0].mxu0 %v1886
  %v1954 = vpop.f32.mrb[0].mxu0
  %v1955 = vadd.f32 %v237, %v1954
  %v1956 = vpop.f32.mrb[0].mxu0
  %1957 = vdwg.mxu0
  %v1958 = vrot.slane %v1806, 7
  %v1959 = vsel %vm59, %v1958, %v1958
  %v1960 = vsel %vm245, %v1959, 0
  %1962 = vmatprep.subr.mxu0 0.0
  %1963 = vmatpush1.msra.mxu0 %v184
  %1964 = vmatprep.subr.mxu0 0.0
  %1965 = vmatpush1.msra.mxu0 %v185
  %1966 = vmatprep.subr.mxu0 0.0
  %1967 = vmatpush1.msra.mxu0 %v186
  %1968 = vmatprep.subr.mxu0 0.0
  %1969 = vmatpush1.msra.mxu0 %v187
  %1970 = vmatprep.subr.mxu0 0.0
  %1971 = vmatpush1.msra.mxu0 %v188
  %1972 = vmatprep.subr.mxu0 0.0
  %1973 = vmatpush1.msra.mxu0 %v189
  %1974 = vmatprep.subr.mxu0 0.0
  %1975 = vmatpush1.msra.mxu0 %v190
  %1976 = vmatprep.subr.mxu0 0.0
  %1977 = vmatpush1.msra.mxu0 %v191
  %1978 = vmatprep.subr.mxu0 0.0
  %1979 = vmatpush1.msra.mxu0 0.0
  %1980 = vmatprep.subr.mxu0 0.0
  %1981 = vmatpush1.msra.mxu0 0.0
  %1982 = vmatprep.subr.mxu0 0.0
  %1983 = vmatpush1.msra.mxu0 0.0
  %1984 = vmatprep.subr.mxu0 0.0
  %1985 = vmatpush1.msra.mxu0 0.0
  %1986 = vmatprep.subr.mxu0 0.0
  %1987 = vmatpush1.msra.mxu0 0.0
  %1988 = vmatprep.subr.mxu0 0.0
  %1989 = vmatpush1.msra.mxu0 0.0
  %1990 = vmatprep.subr.mxu0 0.0
  %1991 = vmatpush1.msra.mxu0 0.0
  %1992 = vmatprep.subr.mxu0 0.0
  %1993 = vmatpush1.msra.mxu0 0.0
  %1994 = vmatprep.subr.mxu0 0.0
  %1995 = vmatpush1.msra.mxu0 0.0
  %1996 = vmatprep.subr.mxu0 0.0
  %1997 = vmatpush1.msra.mxu0 0.0
  %1998 = vmatprep.subr.mxu0 0.0
  %1999 = vmatpush1.msra.mxu0 0.0
  %2000 = vmatprep.subr.mxu0 0.0
  %2001 = vmatpush1.msra.mxu0 0.0
  %2002 = vmatprep.subr.mxu0 0.0
  %2003 = vmatpush1.msra.mxu0 0.0
  %2004 = vmatprep.subr.mxu0 0.0
  %2005 = vmatpush1.msra.mxu0 0.0
  %2006 = vmatprep.subr.mxu0 0.0
  %2007 = vmatpush1.msra.mxu0 0.0
  %2008 = vmatprep.subr.mxu0 0.0
  %2009 = vmatpush1.msra.mxu0 0.0
  %2010 = vmatprep.subr.mxu0 0.0
  %2011 = vmatpush1.msra.mxu0 0.0
  %2012 = vmatprep.subr.mxu0 0.0
  %2013 = vmatpush1.msra.mxu0 0.0
  %2014 = vmatprep.subr.mxu0 0.0
  %2015 = vmatpush1.msra.mxu0 0.0
  %2016 = vmatprep.subr.mxu0 0.0
  %2017 = vmatpush1.msra.mxu0 0.0
  %2018 = vmatprep.subr.mxu0 0.0
  %2019 = vmatpush1.msra.mxu0 0.0
  %2020 = vmatprep.subr.mxu0 0.0
  %2021 = vmatpush1.msra.mxu0 0.0
  %2022 = vmatprep.subr.mxu0 0.0
  %2023 = vmatpush1.msra.mxu0 0.0
  %2024 = vmatprep.subr.mxu0 0.0
  %2025 = vmatpush1.msra.mxu0 0.0
  %2026 = vmatprep.mubr.f32.mxu0 0.0
  %2027 = vmatmul.mubr.f32.gmra.mrb[0].mxu0 %v1960
  %v2028 = vpop.f32.mrb[0].mxu0
  %v2029 = vadd.f32 %v241, %v2028
  %v2030 = vpop.f32.mrb[0].mxu0
  %2031 = vdwg.mxu0
  %v2032 = vtanh.pop %v1881
  %v2033 = vtanh.pop %v1955
  %v2034 = vtanh.pop %v2029
  %2036 = vrot.lane.b32.xlu0 %v2033, 32
  %v2037 = vpop.permute.xlu0 %2036
  %v2039 = vsel %vm225, %v2032, %v2037
  %2041 = vrot.lane.b32.xlu0 %v2034, 32
  %v2042 = vpop.permute.xlu0 %2041
  %v2044 = vsel %vm225, %v2033, %v2042
  %v2046 = vsel %vm245, %v2039, 0
  %2048 = vmatprep.subr.mxu0 0.0
  %2049 = vmatpush1.msra.mxu0 %v176
  %2050 = vmatprep.subr.mxu0 0.0
  %2051 = vmatpush1.msra.mxu0 %v177
  %2052 = vmatprep.subr.mxu0 0.0
  %2053 = vmatpush1.msra.mxu0 %v178
  %2054 = vmatprep.subr.mxu0 0.0
  %2055 = vmatpush1.msra.mxu0 %v179
  %2056 = vmatprep.subr.mxu0 0.0
  %2057 = vmatpush1.msra.mxu0 %v180
  %2058 = vmatprep.subr.mxu0 0.0
  %2059 = vmatpush1.msra.mxu0 %v181
  %2060 = vmatprep.subr.mxu0 0.0
  %2061 = vmatpush1.msra.mxu0 %v182
  %2062 = vmatprep.subr.mxu0 0.0
  %2063 = vmatpush1.msra.mxu0 %v183
  %2064 = vmatprep.subr.mxu0 0.0
  %2065 = vmatpush1.msra.mxu0 0.0
  %2066 = vmatprep.subr.mxu0 0.0
  %2067 = vmatpush1.msra.mxu0 0.0
  %2068 = vmatprep.subr.mxu0 0.0
  %2069 = vmatpush1.msra.mxu0 0.0
  %2070 = vmatprep.subr.mxu0 0.0
  %2071 = vmatpush1.msra.mxu0 0.0
  %2072 = vmatprep.subr.mxu0 0.0
  %2073 = vmatpush1.msra.mxu0 0.0
  %2074 = vmatprep.subr.mxu0 0.0
  %2075 = vmatpush1.msra.mxu0 0.0
  %2076 = vmatprep.subr.mxu0 0.0
  %2077 = vmatpush1.msra.mxu0 0.0
  %2078 = vmatprep.subr.mxu0 0.0
  %2079 = vmatpush1.msra.mxu0 0.0
  %2080 = vmatprep.subr.mxu0 0.0
  %2081 = vmatpush1.msra.mxu0 0.0
  %2082 = vmatprep.subr.mxu0 0.0
  %2083 = vmatpush1.msra.mxu0 0.0
  %2084 = vmatprep.subr.mxu0 0.0
  %2085 = vmatpush1.msra.mxu0 0.0
  %2086 = vmatprep.subr.mxu0 0.0
  %2087 = vmatpush1.msra.mxu0 0.0
  %2088 = vmatprep.subr.mxu0 0.0
  %2089 = vmatpush1.msra.mxu0 0.0
  %2090 = vmatprep.subr.mxu0 0.0
  %2091 = vmatpush1.msra.mxu0 0.0
  %2092 = vmatprep.subr.mxu0 0.0
  %2093 = vmatpush1.msra.mxu0 0.0
  %2094 = vmatprep.subr.mxu0 0.0
  %2095 = vmatpush1.msra.mxu0 0.0
  %2096 = vmatprep.subr.mxu0 0.0
  %2097 = vmatpush1.msra.mxu0 0.0
  %2098 = vmatprep.subr.mxu0 0.0
  %2099 = vmatpush1.msra.mxu0 0.0
  %2100 = vmatprep.subr.mxu0 0.0
  %2101 = vmatpush1.msra.mxu0 0.0
  %2102 = vmatprep.subr.mxu0 0.0
  %2103 = vmatpush1.msra.mxu0 0.0
  %2104 = vmatprep.subr.mxu0 0.0
  %2105 = vmatpush1.msra.mxu0 0.0
  %2106 = vmatprep.subr.mxu0 0.0
  %2107 = vmatpush1.msra.mxu0 0.0
  %2108 = vmatprep.subr.mxu0 0.0
  %2109 = vmatpush1.msra.mxu0 0.0
  %2110 = vmatprep.subr.mxu0 0.0
  %2111 = vmatpush1.msra.mxu0 0.0
  %2112 = vmatprep.mubr.f32.mxu0 0.0
  %2113 = vmatmul.mubr.f32.gmra.mrb[0].mxu0 %v2046
  %v2114 = vpop.f32.mrb[0].mxu0
  %v2115 = vadd.f32 %v237, %v2114
  %v2116 = vpop.f32.mrb[0].mxu0
  %2117 = vdwg.mxu0
  %v2119 = vsel %vm245, %v2044, 0
  %2121 = vmatprep.subr.mxu0 0.0
  %2122 = vmatpush1.msra.mxu0 %v184
  %2123 = vmatprep.subr.mxu0 0.0
  %2124 = vmatpush1.msra.mxu0 %v185
  %2125 = vmatprep.subr.mxu0 0.0
  %2126 = vmatpush1.msra.mxu0 %v186
  %2127 = vmatprep.subr.mxu0 0.0
  %2128 = vmatpush1.msra.mxu0 %v187
  %2129 = vmatprep.subr.mxu0 0.0
  %2130 = vmatpush1.msra.mxu0 %v188
  %2131 = vmatprep.subr.mxu0 0.0
  %2132 = vmatpush1.msra.mxu0 %v189
  %2133 = vmatprep.subr.mxu0 0.0
  %2134 = vmatpush1.msra.mxu0 %v190
  %2135 = vmatprep.subr.mxu0 0.0
  %2136 = vmatpush1.msra.mxu0 %v191
  %2137 = vmatprep.subr.mxu0 0.0
  %2138 = vmatpush1.msra.mxu0 0.0
  %2139 = vmatprep.subr.mxu0 0.0
  %2140 = vmatpush1.msra.mxu0 0.0
  %2141 = vmatprep.subr.mxu0 0.0
  %2142 = vmatpush1.msra.mxu0 0.0
  %2143 = vmatprep.subr.mxu0 0.0
  %2144 = vmatpush1.msra.mxu0 0.0
  %2145 = vmatprep.subr.mxu0 0.0
  %2146 = vmatpush1.msra.mxu0 0.0
  %2147 = vmatprep.subr.mxu0 0.0
  %2148 = vmatpush1.msra.mxu0 0.0
  %2149 = vmatprep.subr.mxu0 0.0
  %2150 = vmatpush1.msra.mxu0 0.0
  %2151 = vmatprep.subr.mxu0 0.0
  %2152 = vmatpush1.msra.mxu0 0.0
  %2153 = vmatprep.subr.mxu0 0.0
  %2154 = vmatpush1.msra.mxu0 0.0
  %2155 = vmatprep.subr.mxu0 0.0
  %2156 = vmatpush1.msra.mxu0 0.0
  %2157 = vmatprep.subr.mxu0 0.0
  %2158 = vmatpush1.msra.mxu0 0.0
  %2159 = vmatprep.subr.mxu0 0.0
  %2160 = vmatpush1.msra.mxu0 0.0
  %2161 = vmatprep.subr.mxu0 0.0
  %2162 = vmatpush1.msra.mxu0 0.0
  %2163 = vmatprep.subr.mxu0 0.0
  %2164 = vmatpush1.msra.mxu0 0.0
  %2165 = vmatprep.subr.mxu0 0.0
  %2166 = vmatpush1.msra.mxu0 0.0
  %2167 = vmatprep.subr.mxu0 0.0
  %2168 = vmatpush1.msra.mxu0 0.0
  %2169 = vmatprep.subr.mxu0 0.0
  %2170 = vmatpush1.msra.mxu0 0.0
  %2171 = vmatprep.subr.mxu0 0.0
  %2172 = vmatpush1.msra.mxu0 0.0
  %2173 = vmatprep.subr.mxu0 0.0
  %2174 = vmatpush1.msra.mxu0 0.0
  %2175 = vmatprep.subr.mxu0 0.0
  %2176 = vmatpush1.msra.mxu0 0.0
  %2177 = vmatprep.subr.mxu0 0.0
  %2178 = vmatpush1.msra.mxu0 0.0
  %2179 = vmatprep.subr.mxu0 0.0
  %2180 = vmatpush1.msra.mxu0 0.0
  %2181 = vmatprep.subr.mxu0 0.0
  %2182 = vmatpush1.msra.mxu0 0.0
  %2183 = vmatprep.subr.mxu0 0.0
  %2184 = vmatpush1.msra.mxu0 0.0
  %2185 = vmatprep.mubr.f32.mxu0 0.0
  %2186 = vmatmul.mubr.f32.gmra.mrb[0].mxu0 %v2119
  %v2187 = vpop.f32.mrb[0].mxu0
  %v2188 = vadd.f32 %v241, %v2187
  %v2189 = vpop.f32.mrb[0].mxu0
  %2190 = vdwg.mxu0
  %v2191 = vtanh.pop %v2115
  %v2192 = vtanh.pop %v2188
  %2194 = vrot.lane.b32.xlu0 %v2192, 32
  %v2195 = vpop.permute.xlu0 %2194
  %v2197 = vsel %vm225, %v2191, %v2195
  %v2199 = vsel %vm245, %v2197, 0
  %2201 = vmatprep.subr.mxu0 0.0
  %2202 = vmatpush1.msra.mxu0 %v184
  %2203 = vmatprep.subr.mxu0 0.0
  %2204 = vmatpush1.msra.mxu0 %v185
  %2205 = vmatprep.subr.mxu0 0.0
  %2206 = vmatpush1.msra.mxu0 %v186
  %2207 = vmatprep.subr.mxu0 0.0
  %2208 = vmatpush1.msra.mxu0 %v187
  %2209 = vmatprep.subr.mxu0 0.0
  %2210 = vmatpush1.msra.mxu0 %v188
  %2211 = vmatprep.subr.mxu0 0.0
  %2212 = vmatpush1.msra.mxu0 %v189
  %2213 = vmatprep.subr.mxu0 0.0
  %2214 = vmatpush1.msra.mxu0 %v190
  %2215 = vmatprep.subr.mxu0 0.0
  %2216 = vmatpush1.msra.mxu0 %v191
  %2217 = vmatprep.subr.mxu0 0.0
  %2218 = vmatpush1.msra.mxu0 0.0
  %2219 = vmatprep.subr.mxu0 0.0
  %2220 = vmatpush1.msra.mxu0 0.0
  %2221 = vmatprep.subr.mxu0 0.0
  %2222 = vmatpush1.msra.mxu0 0.0
  %2223 = vmatprep.subr.mxu0 0.0
  %2224 = vmatpush1.msra.mxu0 0.0
  %2225 = vmatprep.subr.mxu0 0.0
  %2226 = vmatpush1.msra.mxu0 0.0
  %2227 = vmatprep.subr.mxu0 0.0
  %2228 = vmatpush1.msra.mxu0 0.0
  %2229 = vmatprep.subr.mxu0 0.0
  %2230 = vmatpush1.msra.mxu0 0.0
  %2231 = vmatprep.subr.mxu0 0.0
  %2232 = vmatpush1.msra.mxu0 0.0
  %2233 = vmatprep.subr.mxu0 0.0
  %2234 = vmatpush1.msra.mxu0 0.0
  %2235 = vmatprep.subr.mxu0 0.0
  %2236 = vmatpush1.msra.mxu0 0.0
  %2237 = vmatprep.subr.mxu0 0.0
  %2238 = vmatpush1.msra.mxu0 0.0
  %2239 = vmatprep.subr.mxu0 0.0
  %2240 = vmatpush1.msra.mxu0 0.0
  %2241 = vmatprep.subr.mxu0 0.0
  %2242 = vmatpush1.msra.mxu0 0.0
  %2243 = vmatprep.subr.mxu0 0.0
  %2244 = vmatpush1.msra.mxu0 0.0
  %2245 = vmatprep.subr.mxu0 0.0
  %2246 = vmatpush1.msra.mxu0 0.0
  %2247 = vmatprep.subr.mxu0 0.0
  %2248 = vmatpush1.msra.mxu0 0.0
  %2249 = vmatprep.subr.mxu0 0.0
  %2250 = vmatpush1.msra.mxu0 0.0
  %2251 = vmatprep.subr.mxu0 0.0
  %2252 = vmatpush1.msra.mxu0 0.0
  %2253 = vmatprep.subr.mxu0 0.0
  %2254 = vmatpush1.msra.mxu0 0.0
  %2255 = vmatprep.subr.mxu0 0.0
  %2256 = vmatpush1.msra.mxu0 0.0
  %2257 = vmatprep.subr.mxu0 0.0
  %2258 = vmatpush1.msra.mxu0 0.0
  %2259 = vmatprep.subr.mxu0 0.0
  %2260 = vmatpush1.msra.mxu0 0.0
  %2261 = vmatprep.subr.mxu0 0.0
  %2262 = vmatpush1.msra.mxu0 0.0
  %2263 = vmatprep.subr.mxu0 0.0
  %2264 = vmatpush1.msra.mxu0 0.0
  %2265 = vmatprep.mubr.f32.mxu0 0.0
  %2266 = vmatmul.mubr.f32.gmra.mrb[0].mxu0 %v2199
  %v2267 = vpop.f32.mrb[0].mxu0
  %v2268 = vadd.f32 %v241, %v2267
  %v2269 = vpop.f32.mrb[0].mxu0
  %2270 = vdwg.mxu0
  %v2271 = vtanh.pop %v2268
  %v2272 = vld [vmem:[%s4] sm:$0x1]
  %v2274 = vlaneseq
  %v2275 = vshrl.u32 %v2274, 7
  %v2276 = vsub.s32 0, %v2275
  %v2277 = vrot.slane %v2272, %v2276
  %v2279 = vmul.f32 %v2271, %v2277
  %v2280 = vsel %vm225, %v2279, 0.0
  %2281 = vadd.xlane.f32.xlu0 %v2280
  %v2282 = vpop.xlane.xlu0 %2281
  %s2283 = sld [smem:[#allocation2]]
  %v2284 = vstv %s2283
  %v2285 = vadd.f32 %v2282, %v2284
  %vm2286 = vcmask 7168
  %2287 = vst.msk [vmem:[%s6] sm:$0xff] %vm2286, %v2285
  // Predicated region
  $region26: #{tpu_custom_call.1} parent=0 // pred_check
    _
  $region27: #{tpu_custom_call.1} parent=0 // pred_check_branch
    %2289 = sbr.rel (0) target = $region29
  $region28: #{tpu_custom_call.1} parent=0 // pred_region
    _
  $region29: #{tpu_custom_call.1} parent=0 // pred_fallthru
    _
  // Predicated region
  $region30: #{tpu_custom_call.1} parent=0 // pred_check
    _
  $region31: #{tpu_custom_call.1} parent=0 // pred_check_branch
    %2291 = sbr.rel (0) target = $region33
  $region32: #{tpu_custom_call.1} parent=0 // pred_region
    _
  $region33: #{tpu_custom_call.1} parent=0 // pred_fallthru
    _

</llo_original>
